<compile_context>
chip_gen: v6e
topology: v6e:2x2x1
jax: 0.10.0
libtpu: 0.0.40
codegen_flags: <defaults>
</compile_context>

<pallas_src>
import functools
import jax
import jax.numpy as jnp
from jax.experimental import pallas as pl
from jax.experimental.pallas import tpu as pltpu  # noqa: F401


DP = 128  # lane-padded per-tower feature width (real feature dim D <= DP)


# ----------------------------------------------------------------------------
# Fused forward kernel (single grid-less invocation, everything VMEM-resident)
# ----------------------------------------------------------------------------

def _top_hicl_kernel(adj_j_ref, adj_st_ref, xj0_ref, xs0_ref,
                     wcj_ref, wcs_ref, bcj_ref, bcs_ref,
                     selj_ref, sels_all_ref, out_ref,
                     *, temp, num_layers, d):
    f32 = jnp.float32
    bf16 = jnp.bfloat16

    adj_j = adj_j_ref[...]            # [N_j, N_s] bf16
    adj_st = adj_st_ref[...]          # [N_s, N_j] bf16 (adj_s^T, transposed on host)

    cur_j = xj0_ref[...]              # [N_j, 2*DP] f32, packed [E_j | G_j]
    cur_s = xs0_ref[...]              # [N_s, 2*DP] f32, packed [E_s | G_s]
    sum_j = cur_j
    sum_s = cur_s

    def tower_update(agg, w_ref, l, b):
        # agg: [N, 2*DP] f32; only the first `d` lanes of each DP-half are
        # nonzero, so contracting the compact [d, DP] weights is exact.
        e_in = agg[:, 0:d].astype(bf16)              # [N, d]
        g_in = agg[:, DP:DP + d].astype(bf16)        # [N, d]
        out_e = jnp.dot(e_in, w_ref[l, 0], preferred_element_type=f32)   # [N, DP]
        out_g = jnp.dot(g_in, w_ref[l, 1], preferred_element_type=f32)   # [N, DP]
        return jnp.maximum(jnp.concatenate([out_e, out_g], axis=1) + b, 0.0)

    # Static unroll over layers; embeddings stay in vregs/VMEM.
    for l in range(num_layers):
        b_j = bcj_ref[l]              # [1, 2*DP] f32 = [b_j | b_j_aug]
        b_s = bcs_ref[l]              # [1, 2*DP] f32 = [b_s | b_s_aug]

        # Shared aggregation for the E and G towers (one bf16 matmul per side).
        agg_j = jnp.dot(adj_j, cur_s.astype(bf16), preferred_element_type=f32)
        agg_s = jnp.dot(adj_st, cur_j.astype(bf16), preferred_element_type=f32)

        # Residual + ReLU(linear) per tower via compact per-tower weights.
        new_j = cur_j + tower_update(agg_j, wcj_ref, l, b_j)
        new_s = cur_s + tower_update(agg_s, wcs_ref, l, b_s)

        sum_j = sum_j + new_j
        sum_s = sum_s + new_s
        cur_j, cur_s = new_j, new_s

    inv_cnt = 1.0 / float(num_layers + 1)
    mean_j = sum_j * inv_cnt
    mean_s = sum_s * inv_cnt

    def l2norm_packed(x):
        # Normalize the E half and G half independently (per row), scaling the
        # packed tensor in place with a lane-selected inverse norm (no concat).
        e = x[:, :DP]
        g = x[:, DP:]
        inv_e = jax.lax.rsqrt(jnp.sum(e * e, axis=1, keepdims=True) + 1e-24)
        inv_g = jax.lax.rsqrt(jnp.sum(g * g, axis=1, keepdims=True) + 1e-24)
        lane = jax.lax.broadcasted_iota(jnp.int32, x.shape, 1)
        return x * jnp.where(lane < DP, inv_e, inv_g)

    normed_j = l2norm_packed(mean_j)      # [N_j, 2*DP] = [Ej | Gj] row-normalized
    normed_s = l2norm_packed(mean_s)      # [N_s, 2*DP] = [Es | Gs]

    # Gathers via one-hot matmuls; the two normed_s gathers are merged.
    selv_j = jnp.dot(selj_ref[...], normed_j, preferred_element_type=f32)      # [B, 2*DP]
    selv_s = jnp.dot(sels_all_ref[...], normed_s, preferred_element_type=f32)  # [B+K*B, 2*DP]

    bsz = selj_ref.shape[0]
    ej_sel = selv_j[:, :DP]               # E_j[j_ids]
    gj_sel = selv_j[:, DP:]               # G_j[j_ids]
    es_sel = selv_s[:bsz, :DP]            # E_s[s_ids]
    gs_sel = selv_s[:bsz, DP:]            # G_s[s_ids]
    neg_emb = selv_s[bsz:, :DP]           # E_s[negs]  (K*B rows)

    inv_t = 1.0 / temp
    dims = (((1,), (1,)), ((), ()))       # contract last dims == A @ B^T on the MXU

    s1 = jax.lax.dot_general(gj_sel, ej_sel, dims,
                             preferred_element_type=f32) * inv_t    # [B, B]
    s2 = jax.lax.dot_general(neg_emb, gs_sel, dims,
                             preferred_element_type=f32) * inv_t    # [K*B, B]

    def lse_mean(s):
        # Exact, overflow-safe  mean_i log( sum_j exp(s_ij) + 1e-8 )
        m = jnp.maximum(jnp.max(s, axis=1, keepdims=True), 0.0)
        t = jnp.sum(jnp.exp(s - m), axis=1, keepdims=True) + 1e-8 * jnp.exp(-m)
        return jnp.mean(m + jnp.log(t))

    neg_score = lse_mean(s1) + lse_mean(s2)

    def pos_mean(a, b):
        # torch clamps AFTER the division by temp, bounds [-1, 1] -- match it.
        sim = jnp.sum(a * b, axis=1, keepdims=True) * inv_t
        return jnp.mean(jnp.clip(sim, -1.0, 1.0))

    pos_score = pos_mean(gj_sel, ej_sel) + pos_mean(gs_sel, es_sel)

    loss_cl = (neg_score - pos_score) * 0.2

    # Single lane-dense splat store; host reads lane 0.  (The param-only L2
    # regularizer is added on the host.)
    out_ref[...] = jnp.zeros((1, DP), f32) + loss_cl


# ----------------------------------------------------------------------------
# One-time packing of parameters / graph tensors (hoisted out of the per-call
# forward): compact bf16 weights, packed embeddings, transposed adjacency,
# and the parameter-only L2 regularizer.
# ----------------------------------------------------------------------------

def pack_static(params, e_j_0, e_s_0, g_j_0, g_s_0, adj_j, adj_s, num_layers):
    L = num_layers

    def pad_cols(x):
        return jnp.pad(x, ((0, 0), (0, DP - x.shape[1])))

    def pack_w(w):   # torch Linear weight [out, in] -> [in, out], lane-pad out dim
        wt = w.T
        return jnp.pad(wt, ((0, 0), (0, DP - wt.shape[1]))).astype(jnp.bfloat16)

    def pack_b(b):
        return jnp.pad(b, (0, DP - b.shape[0]))

    # Pack E and G towers along the feature axis (lane-dense 2*DP = 256).
    x_j0 = jnp.concatenate([pad_cols(e_j_0), pad_cols(g_j_0)], axis=1)   # [N_j, 256]
    x_s0 = jnp.concatenate([pad_cols(e_s_0), pad_cols(g_s_0)], axis=1)   # [N_s, 256]

    # Compact per-tower weights: [L, 2, D, DP] bf16 (2 = E-tower / G-tower).
    wcj = jnp.stack([jnp.stack([pack_w(params['W_j'][l]),
                                pack_w(params['W_j_aug'][l])]) for l in range(L)])
    wcs = jnp.stack([jnp.stack([pack_w(params['W_s'][l]),
                                pack_w(params['W_s_aug'][l])]) for l in range(L)])
    bcj = jnp.stack([jnp.concatenate([pack_b(params['b_j'][l]),
                                      pack_b(params['b_j_aug'][l])])[None, :]
                     for l in range(L)]).astype(jnp.float32)
    bcs = jnp.stack([jnp.concatenate([pack_b(params['b_s'][l]),
                                      pack_b(params['b_s_aug'][l])])[None, :]
                     for l in range(L)]).astype(jnp.float32)

    # L2 regularizer over ALL module parameters (param-only -> hoisted here).
    reg = jnp.asarray(0.0, jnp.float32)
    for name in ('W_j', 'W_s', 'W_j_aug', 'W_s_aug',
                 'b_j', 'b_s', 'b_j_aug', 'b_s_aug'):
        for l in range(L):
            p = params[name][l].astype(jnp.float32)
            reg = reg + jnp.sum(p * p)

    return dict(
        x_j0=x_j0.astype(jnp.float32), x_s0=x_s0.astype(jnp.float32),
        adj_j=adj_j.astype(jnp.bfloat16), adj_st=adj_s.T.astype(jnp.bfloat16),
        wcj=wcj, wcs=wcs, bcj=bcj, bcs=bcs, reg=reg)


# ----------------------------------------------------------------------------
# Per-call forward: build tiny one-hot gather matrices, launch the fused kernel
# ----------------------------------------------------------------------------

@functools.partial(jax.jit, static_argnames=("temp", "lambda_1", "num_layers"))
def top_hicl_forward(packed, j_ids, s_ids, negs, *, temp, lambda_1, num_layers):
    N_j = packed['x_j0'].shape[0]
    N_s = packed['x_s0'].shape[0]
    D = packed['wcj'].shape[2]

    sel_j = jax.nn.one_hot(j_ids, N_j, dtype=jnp.float32)                 # [B, N_j]
    sel_s_all = jnp.concatenate(
        [jax.nn.one_hot(s_ids, N_s, dtype=jnp.float32),                   # [B, N_s]
         jax.nn.one_hot(negs.reshape(-1), N_s, dtype=jnp.float32)],       # [K*B, N_s]
        axis=0)                                                           # [(1+K)*B, N_s]

    out = pl.pallas_call(
        functools.partial(_top_hicl_kernel, temp=float(temp),
                          num_layers=num_layers, d=D),
        out_shape=jax.ShapeDtypeStruct((1, DP), jnp.float32),
    )(packed['adj_j'], packed['adj_st'], packed['x_j0'], packed['x_s0'],
      packed['wcj'], packed['wcs'], packed['bcj'], packed['bcs'],
      sel_j, sel_s_all)

    loss_cl = out[0, 0]
    loss_reg = packed['reg'] * lambda_1
    loss = loss_cl + loss_reg
    return loss, loss_cl, loss_reg


# ----------------------------------------------------------------------------
# Deterministic synthetic setup + run
# ----------------------------------------------------------------------------

if __name__ == "__main__":
    key = jax.random.PRNGKey(0)
    N_j, N_s, D = 16, 24, 32          # jobs, skills, embedding dim
    num_layers = 2
    B, K = 8, 4                       # batch of ids, number of negative sets
    temp, lambda_1 = 0.2, 1e-4

    keys = jax.random.split(key, 12)
    e_j_0 = jax.random.normal(keys[0], (N_j, D), jnp.float32)
    e_s_0 = jax.random.normal(keys[1], (N_s, D), jnp.float32)

    # update_aug_embeddings: G_*_list[0] = F.normalize(aug_e_*, p=2, dim=1)
    aug_e_j = jax.random.normal(keys[2], (N_j, D), jnp.float32)
    aug_e_s = jax.random.normal(keys[3], (N_s, D), jnp.float32)

    def l2n(x):
        return x / jnp.maximum(jnp.sqrt(jnp.sum(x * x, axis=1, keepdims=True)), 1e-12)

    g_j_0 = l2n(aug_e_j)
    g_s_0 = l2n(aug_e_s)

    # Dense "normalized" adjacencies.
    adj_j = jax.random.uniform(keys[4], (N_j, N_s), jnp.float32) / N_s
    adj_s = jax.random.uniform(keys[5], (N_j, N_s), jnp.float32) / N_j

    j_ids = jax.random.randint(keys[6], (B,), 0, N_j)
    s_ids = jax.random.randint(keys[7], (B,), 0, N_s)
    negs = jax.random.randint(keys[8], (K, B), 0, N_s)

    def mk_lin(k, scale=0.1):
        kw, kb = jax.random.split(k)
        w = jax.random.normal(kw, (D, D), jnp.float32) * scale   # PyTorch [out, in]
        b = jax.random.normal(kb, (D,), jnp.float32) * scale
        return w, b

    pkeys = jax.random.split(keys[9], 4 * num_layers)
    params = {'W_j': [], 'b_j': [], 'W_s': [], 'b_s': [],
              'W_j_aug': [], 'b_j_aug': [], 'W_s_aug': [], 'b_s_aug': []}
    idx = 0
    for name in ['j', 's', 's_aug', 'j_aug']:
        for _ in range(num_layers):
            w, b = mk_lin(pkeys[idx]); idx += 1
            params['W_' + name].append(w)
            params['b_' + name].append(b)

    # One-time packing (weights / embeddings / adjacency / regularizer).
    packed = pack_static(params, e_j_0, e_s_0, g_j_0, g_s_0, adj_j, adj_s,
                         num_layers)
    packed = jax.tree_util.tree_map(jax.block_until_ready, packed)

    loss, loss_cl, loss_reg = top_hicl_forward(
        packed, j_ids, s_ids, negs,
        temp=temp, lambda_1=lambda_1, num_layers=num_layers)

    jax.block_until_ready((loss, loss_cl, loss_reg))
    assert bool(jnp.isfinite(loss)) and bool(jnp.isfinite(loss_cl)) \
        and bool(jnp.isfinite(loss_reg))
    print("KERNEL_OK")
</pallas_src>

<mosaic_0001>
module attributes {stable_mosaic.version = 11 : i64} {
  func.func @_top_hicl_kernel(%arg0: memref<16x24xbf16, #tpu.memory_space<vmem>>, %arg1: memref<24x16xbf16, #tpu.memory_space<vmem>>, %arg2: memref<16x256xf32, #tpu.memory_space<vmem>>, %arg3: memref<24x256xf32, #tpu.memory_space<vmem>>, %arg4: memref<2x2x32x128xbf16, #tpu.memory_space<vmem>>, %arg5: memref<2x2x32x128xbf16, #tpu.memory_space<vmem>>, %arg6: memref<2x1x256xf32, #tpu.memory_space<vmem>>, %arg7: memref<2x1x256xf32, #tpu.memory_space<vmem>>, %arg8: memref<8x16xf32, #tpu.memory_space<vmem>>, %arg9: memref<40x24xf32, #tpu.memory_space<vmem>>, %arg10: memref<1x128xf32, #tpu.memory_space<vmem>>) attributes {dimension_semantics = [], scalar_prefetch = 0 : i64, scratch_operands = 0 : i64, tpu.core_type = #tpu.core_type<tc>} {
    %c0 = arith.constant 0 : index
    %c0_0 = arith.constant 0 : index
    %0 = vector.load %arg0[%c0, %c0_0] : memref<16x24xbf16, #tpu.memory_space<vmem>>, vector<16x24xbf16>
    %c0_1 = arith.constant 0 : index
    %c0_2 = arith.constant 0 : index
    %1 = vector.load %arg1[%c0_1, %c0_2] : memref<24x16xbf16, #tpu.memory_space<vmem>>, vector<24x16xbf16>
    %c0_3 = arith.constant 0 : index
    %c0_4 = arith.constant 0 : index
    %2 = vector.load %arg2[%c0_3, %c0_4] : memref<16x256xf32, #tpu.memory_space<vmem>>, vector<16x256xf32>
    %c0_5 = arith.constant 0 : index
    %c0_6 = arith.constant 0 : index
    %3 = vector.load %arg3[%c0_5, %c0_6] : memref<24x256xf32, #tpu.memory_space<vmem>>, vector<24x256xf32>
    %c0_7 = arith.constant 0 : index
    %c0_8 = arith.constant 0 : index
    %c0_9 = arith.constant 0 : index
    %4 = vector.load %arg6[%c0_7, %c0_8, %c0_9] : memref<2x1x256xf32, #tpu.memory_space<vmem>>, vector<1x1x256xf32>
    %5 = vector.shape_cast %4 : vector<1x1x256xf32> to vector<1x256xf32>
    %c0_10 = arith.constant 0 : index
    %c0_11 = arith.constant 0 : index
    %c0_12 = arith.constant 0 : index
    %6 = vector.load %arg7[%c0_10, %c0_11, %c0_12] : memref<2x1x256xf32, #tpu.memory_space<vmem>>, vector<1x1x256xf32>
    %7 = vector.shape_cast %6 : vector<1x1x256xf32> to vector<1x256xf32>
    %8 = arith.truncf %3 : vector<24x256xf32> to vector<24x256xbf16>
    %cst = arith.constant dense<0.000000e+00> : vector<16x256xf32>
    %9 = tpu.matmul %0, %8, %cst {dimension_numbers = #tpu.dot_dimension_numbers<[1], [0], [0], [1], [0, 0, 1, 1], [], []>} : vector<16x24xbf16>, vector<24x256xbf16>, vector<16x256xf32> -> vector<16x256xf32>
    %10 = arith.truncf %2 : vector<16x256xf32> to vector<16x256xbf16>
    %cst_13 = arith.constant dense<0.000000e+00> : vector<24x256xf32>
    %11 = tpu.matmul %1, %10, %cst_13 {dimension_numbers = #tpu.dot_dimension_numbers<[1], [0], [0], [1], [0, 0, 1, 1], [], []>} : vector<24x16xbf16>, vector<16x256xbf16>, vector<24x256xf32> -> vector<24x256xf32>
    %12 = vector.extract_strided_slice %9 {offsets = [0, 0], sizes = [16, 32], strides = [1, 1]} : vector<16x256xf32> to vector<16x32xf32>
    %13 = arith.truncf %12 : vector<16x32xf32> to vector<16x32xbf16>
    %14 = vector.extract_strided_slice %9 {offsets = [0, 128], sizes = [16, 32], strides = [1, 1]} : vector<16x256xf32> to vector<16x32xf32>
    %15 = arith.truncf %14 : vector<16x32xf32> to vector<16x32xbf16>
    %c0_14 = arith.constant 0 : index
    %c0_15 = arith.constant 0 : index
    %c0_16 = arith.constant 0 : index
    %c0_17 = arith.constant 0 : index
    %16 = vector.load %arg4[%c0_14, %c0_15, %c0_16, %c0_17] : memref<2x2x32x128xbf16, #tpu.memory_space<vmem>>, vector<1x1x32x128xbf16>
    %17 = vector.shape_cast %16 : vector<1x1x32x128xbf16> to vector<32x128xbf16>
    %cst_18 = arith.constant dense<0.000000e+00> : vector<16x128xf32>
    %18 = tpu.matmul %13, %17, %cst_18 {dimension_numbers = #tpu.dot_dimension_numbers<[1], [0], [0], [1], [0, 0, 1, 1], [], []>} : vector<16x32xbf16>, vector<32x128xbf16>, vector<16x128xf32> -> vector<16x128xf32>
    %c0_19 = arith.constant 0 : index
    %c1 = arith.constant 1 : index
    %c0_20 = arith.constant 0 : index
    %c0_21 = arith.constant 0 : index
    %19 = vector.load %arg4[%c0_19, %c1, %c0_20, %c0_21] : memref<2x2x32x128xbf16, #tpu.memory_space<vmem>>, vector<1x1x32x128xbf16>
    %20 = vector.shape_cast %19 : vector<1x1x32x128xbf16> to vector<32x128xbf16>
    %cst_22 = arith.constant dense<0.000000e+00> : vector<16x128xf32>
    %21 = tpu.matmul %15, %20, %cst_22 {dimension_numbers = #tpu.dot_dimension_numbers<[1], [0], [0], [1], [0, 0, 1, 1], [], []>} : vector<16x32xbf16>, vector<32x128xbf16>, vector<16x128xf32> -> vector<16x128xf32>
    %22 = tpu.concatenate %18, %21 in 1 : vector<16x128xf32>, vector<16x128xf32> -> vector<16x256xf32>
    %23 = vector.broadcast %5 : vector<1x256xf32> to vector<16x256xf32>
    %24 = arith.addf %22, %23 : vector<16x256xf32>
    %cst_23 = arith.constant 0.000000e+00 : f32
    %25 = vector.broadcast %cst_23 : f32 to vector<16x256xf32>
    %26 = arith.maximumf %24, %25 : vector<16x256xf32>
    %27 = arith.addf %2, %26 : vector<16x256xf32>
    %28 = vector.extract_strided_slice %11 {offsets = [0, 0], sizes = [24, 32], strides = [1, 1]} : vector<24x256xf32> to vector<24x32xf32>
    %29 = arith.truncf %28 : vector<24x32xf32> to vector<24x32xbf16>
    %30 = vector.extract_strided_slice %11 {offsets = [0, 128], sizes = [24, 32], strides = [1, 1]} : vector<24x256xf32> to vector<24x32xf32>
    %31 = arith.truncf %30 : vector<24x32xf32> to vector<24x32xbf16>
    %c0_24 = arith.constant 0 : index
    %c0_25 = arith.constant 0 : index
    %c0_26 = arith.constant 0 : index
    %c0_27 = arith.constant 0 : index
    %32 = vector.load %arg5[%c0_24, %c0_25, %c0_26, %c0_27] : memref<2x2x32x128xbf16, #tpu.memory_space<vmem>>, vector<1x1x32x128xbf16>
    %33 = vector.shape_cast %32 : vector<1x1x32x128xbf16> to vector<32x128xbf16>
    %cst_28 = arith.constant dense<0.000000e+00> : vector<24x128xf32>
    %34 = tpu.matmul %29, %33, %cst_28 {dimension_numbers = #tpu.dot_dimension_numbers<[1], [0], [0], [1], [0, 0, 1, 1], [], []>} : vector<24x32xbf16>, vector<32x128xbf16>, vector<24x128xf32> -> vector<24x128xf32>
    %c0_29 = arith.constant 0 : index
    %c1_30 = arith.constant 1 : index
    %c0_31 = arith.constant 0 : index
    %c0_32 = arith.constant 0 : index
    %35 = vector.load %arg5[%c0_29, %c1_30, %c0_31, %c0_32] : memref<2x2x32x128xbf16, #tpu.memory_space<vmem>>, vector<1x1x32x128xbf16>
    %36 = vector.shape_cast %35 : vector<1x1x32x128xbf16> to vector<32x128xbf16>
    %cst_33 = arith.constant dense<0.000000e+00> : vector<24x128xf32>
    %37 = tpu.matmul %31, %36, %cst_33 {dimension_numbers = #tpu.dot_dimension_numbers<[1], [0], [0], [1], [0, 0, 1, 1], [], []>} : vector<24x32xbf16>, vector<32x128xbf16>, vector<24x128xf32> -> vector<24x128xf32>
    %38 = tpu.concatenate %34, %37 in 1 : vector<24x128xf32>, vector<24x128xf32> -> vector<24x256xf32>
    %39 = vector.broadcast %7 : vector<1x256xf32> to vector<24x256xf32>
    %40 = arith.addf %38, %39 : vector<24x256xf32>
    %cst_34 = arith.constant 0.000000e+00 : f32
    %41 = vector.broadcast %cst_34 : f32 to vector<24x256xf32>
    %42 = arith.maximumf %40, %41 : vector<24x256xf32>
    %43 = arith.addf %3, %42 : vector<24x256xf32>
    %44 = arith.addf %2, %27 : vector<16x256xf32>
    %45 = arith.addf %3, %43 : vector<24x256xf32>
    %c1_35 = arith.constant 1 : index
    %c0_36 = arith.constant 0 : index
    %c0_37 = arith.constant 0 : index
    %46 = vector.load %arg6[%c1_35, %c0_36, %c0_37] : memref<2x1x256xf32, #tpu.memory_space<vmem>>, vector<1x1x256xf32>
    %47 = vector.shape_cast %46 : vector<1x1x256xf32> to vector<1x256xf32>
    %c1_38 = arith.constant 1 : index
    %c0_39 = arith.constant 0 : index
    %c0_40 = arith.constant 0 : index
    %48 = vector.load %arg7[%c1_38, %c0_39, %c0_40] : memref<2x1x256xf32, #tpu.memory_space<vmem>>, vector<1x1x256xf32>
    %49 = vector.shape_cast %48 : vector<1x1x256xf32> to vector<1x256xf32>
    %50 = arith.truncf %43 : vector<24x256xf32> to vector<24x256xbf16>
    %cst_41 = arith.constant dense<0.000000e+00> : vector<16x256xf32>
    %51 = tpu.matmul %0, %50, %cst_41 {dimension_numbers = #tpu.dot_dimension_numbers<[1], [0], [0], [1], [0, 0, 1, 1], [], []>} : vector<16x24xbf16>, vector<24x256xbf16>, vector<16x256xf32> -> vector<16x256xf32>
    %52 = arith.truncf %27 : vector<16x256xf32> to vector<16x256xbf16>
    %cst_42 = arith.constant dense<0.000000e+00> : vector<24x256xf32>
    %53 = tpu.matmul %1, %52, %cst_42 {dimension_numbers = #tpu.dot_dimension_numbers<[1], [0], [0], [1], [0, 0, 1, 1], [], []>} : vector<24x16xbf16>, vector<16x256xbf16>, vector<24x256xf32> -> vector<24x256xf32>
    %54 = vector.extract_strided_slice %51 {offsets = [0, 0], sizes = [16, 32], strides = [1, 1]} : vector<16x256xf32> to vector<16x32xf32>
    %55 = arith.truncf %54 : vector<16x32xf32> to vector<16x32xbf16>
    %56 = vector.extract_strided_slice %51 {offsets = [0, 128], sizes = [16, 32], strides = [1, 1]} : vector<16x256xf32> to vector<16x32xf32>
    %57 = arith.truncf %56 : vector<16x32xf32> to vector<16x32xbf16>
    %c1_43 = arith.constant 1 : index
    %c0_44 = arith.constant 0 : index
    %c0_45 = arith.constant 0 : index
    %c0_46 = arith.constant 0 : index
    %58 = vector.load %arg4[%c1_43, %c0_44, %c0_45, %c0_46] : memref<2x2x32x128xbf16, #tpu.memory_space<vmem>>, vector<1x1x32x128xbf16>
    %59 = vector.shape_cast %58 : vector<1x1x32x128xbf16> to vector<32x128xbf16>
    %cst_47 = arith.constant dense<0.000000e+00> : vector<16x128xf32>
    %60 = tpu.matmul %55, %59, %cst_47 {dimension_numbers = #tpu.dot_dimension_numbers<[1], [0], [0], [1], [0, 0, 1, 1], [], []>} : vector<16x32xbf16>, vector<32x128xbf16>, vector<16x128xf32> -> vector<16x128xf32>
    %c1_48 = arith.constant 1 : index
    %c1_49 = arith.constant 1 : index
    %c0_50 = arith.constant 0 : index
    %c0_51 = arith.constant 0 : index
    %61 = vector.load %arg4[%c1_48, %c1_49, %c0_50, %c0_51] : memref<2x2x32x128xbf16, #tpu.memory_space<vmem>>, vector<1x1x32x128xbf16>
    %62 = vector.shape_cast %61 : vector<1x1x32x128xbf16> to vector<32x128xbf16>
    %cst_52 = arith.constant dense<0.000000e+00> : vector<16x128xf32>
    %63 = tpu.matmul %57, %62, %cst_52 {dimension_numbers = #tpu.dot_dimension_numbers<[1], [0], [0], [1], [0, 0, 1, 1], [], []>} : vector<16x32xbf16>, vector<32x128xbf16>, vector<16x128xf32> -> vector<16x128xf32>
    %64 = tpu.concatenate %60, %63 in 1 : vector<16x128xf32>, vector<16x128xf32> -> vector<16x256xf32>
    %65 = vector.broadcast %47 : vector<1x256xf32> to vector<16x256xf32>
    %66 = arith.addf %64, %65 : vector<16x256xf32>
    %cst_53 = arith.constant 0.000000e+00 : f32
    %67 = vector.broadcast %cst_53 : f32 to vector<16x256xf32>
    %68 = arith.maximumf %66, %67 : vector<16x256xf32>
    %69 = arith.addf %27, %68 : vector<16x256xf32>
    %70 = vector.extract_strided_slice %53 {offsets = [0, 0], sizes = [24, 32], strides = [1, 1]} : vector<24x256xf32> to vector<24x32xf32>
    %71 = arith.truncf %70 : vector<24x32xf32> to vector<24x32xbf16>
    %72 = vector.extract_strided_slice %53 {offsets = [0, 128], sizes = [24, 32], strides = [1, 1]} : vector<24x256xf32> to vector<24x32xf32>
    %73 = arith.truncf %72 : vector<24x32xf32> to vector<24x32xbf16>
    %c1_54 = arith.constant 1 : index
    %c0_55 = arith.constant 0 : index
    %c0_56 = arith.constant 0 : index
    %c0_57 = arith.constant 0 : index
    %74 = vector.load %arg5[%c1_54, %c0_55, %c0_56, %c0_57] : memref<2x2x32x128xbf16, #tpu.memory_space<vmem>>, vector<1x1x32x128xbf16>
    %75 = vector.shape_cast %74 : vector<1x1x32x128xbf16> to vector<32x128xbf16>
    %cst_58 = arith.constant dense<0.000000e+00> : vector<24x128xf32>
    %76 = tpu.matmul %71, %75, %cst_58 {dimension_numbers = #tpu.dot_dimension_numbers<[1], [0], [0], [1], [0, 0, 1, 1], [], []>} : vector<24x32xbf16>, vector<32x128xbf16>, vector<24x128xf32> -> vector<24x128xf32>
    %c1_59 = arith.constant 1 : index
    %c1_60 = arith.constant 1 : index
    %c0_61 = arith.constant 0 : index
    %c0_62 = arith.constant 0 : index
    %77 = vector.load %arg5[%c1_59, %c1_60, %c0_61, %c0_62] : memref<2x2x32x128xbf16, #tpu.memory_space<vmem>>, vector<1x1x32x128xbf16>
    %78 = vector.shape_cast %77 : vector<1x1x32x128xbf16> to vector<32x128xbf16>
    %cst_63 = arith.constant dense<0.000000e+00> : vector<24x128xf32>
    %79 = tpu.matmul %73, %78, %cst_63 {dimension_numbers = #tpu.dot_dimension_numbers<[1], [0], [0], [1], [0, 0, 1, 1], [], []>} : vector<24x32xbf16>, vector<32x128xbf16>, vector<24x128xf32> -> vector<24x128xf32>
    %80 = tpu.concatenate %76, %79 in 1 : vector<24x128xf32>, vector<24x128xf32> -> vector<24x256xf32>
    %81 = vector.broadcast %49 : vector<1x256xf32> to vector<24x256xf32>
    %82 = arith.addf %80, %81 : vector<24x256xf32>
    %cst_64 = arith.constant 0.000000e+00 : f32
    %83 = vector.broadcast %cst_64 : f32 to vector<24x256xf32>
    %84 = arith.maximumf %82, %83 : vector<24x256xf32>
    %85 = arith.addf %43, %84 : vector<24x256xf32>
    %86 = arith.addf %44, %69 : vector<16x256xf32>
    %87 = arith.addf %45, %85 : vector<24x256xf32>
    %cst_65 = arith.constant 0.333333343 : f32
    %88 = vector.broadcast %cst_65 : f32 to vector<16x256xf32>
    %89 = arith.mulf %86, %88 : vector<16x256xf32>
    %cst_66 = arith.constant 0.333333343 : f32
    %90 = vector.broadcast %cst_66 : f32 to vector<24x256xf32>
    %91 = arith.mulf %87, %90 : vector<24x256xf32>
    %92 = vector.extract_strided_slice %89 {offsets = [0, 0], sizes = [16, 128], strides = [1, 1]} : vector<16x256xf32> to vector<16x128xf32>
    %93 = vector.extract_strided_slice %89 {offsets = [0, 128], sizes = [16, 128], strides = [1, 1]} : vector<16x256xf32> to vector<16x128xf32>
    %94 = arith.mulf %92, %92 : vector<16x128xf32>
    %cst_67 = arith.constant dense<0.000000e+00> : vector<16xf32>
    %95 = vector.multi_reduction <add>, %94, %cst_67 [1] : vector<16x128xf32> to vector<16xf32>
    %96 = vector.shape_cast %95 : vector<16xf32> to vector<16x1xf32>
    %cst_68 = arith.constant 1.000000e-24 : f32
    %97 = vector.broadcast %cst_68 : f32 to vector<16x1xf32>
    %98 = arith.addf %96, %97 : vector<16x1xf32>
    %99 = math.rsqrt %98 : vector<16x1xf32>
    %100 = arith.mulf %93, %93 : vector<16x128xf32>
    %cst_69 = arith.constant dense<0.000000e+00> : vector<16xf32>
    %101 = vector.multi_reduction <add>, %100, %cst_69 [1] : vector<16x128xf32> to vector<16xf32>
    %102 = vector.shape_cast %101 : vector<16xf32> to vector<16x1xf32>
    %cst_70 = arith.constant 1.000000e-24 : f32
    %103 = vector.broadcast %cst_70 : f32 to vector<16x1xf32>
    %104 = arith.addf %102, %103 : vector<16x1xf32>
    %105 = math.rsqrt %104 : vector<16x1xf32>
    %106 = tpu.iota {dimensions = array<i32: 1>} : vector<16x256xi32>
    %c128_i32 = arith.constant 128 : i32
    %107 = vector.broadcast %c128_i32 : i32 to vector<16x256xi32>
    %108 = arith.cmpi slt, %106, %107 : vector<16x256xi32>
    %109 = vector.shape_cast %99 : vector<16x1xf32> to vector<16x1xf32>
    %110 = vector.broadcast %109 : vector<16x1xf32> to vector<16x256xf32>
    %111 = vector.shape_cast %105 : vector<16x1xf32> to vector<16x1xf32>
    %112 = vector.broadcast %111 : vector<16x1xf32> to vector<16x256xf32>
    %113 = arith.select %108, %110, %112 : vector<16x256xi1>, vector<16x256xf32>
    %114 = arith.mulf %89, %113 : vector<16x256xf32>
    %115 = vector.extract_strided_slice %91 {offsets = [0, 0], sizes = [24, 128], strides = [1, 1]} : vector<24x256xf32> to vector<24x128xf32>
    %116 = vector.extract_strided_slice %91 {offsets = [0, 128], sizes = [24, 128], strides = [1, 1]} : vector<24x256xf32> to vector<24x128xf32>
    %117 = arith.mulf %115, %115 : vector<24x128xf32>
    %cst_71 = arith.constant dense<0.000000e+00> : vector<24xf32>
    %118 = vector.multi_reduction <add>, %117, %cst_71 [1] : vector<24x128xf32> to vector<24xf32>
    %119 = vector.shape_cast %118 : vector<24xf32> to vector<24x1xf32>
    %cst_72 = arith.constant 1.000000e-24 : f32
    %120 = vector.broadcast %cst_72 : f32 to vector<24x1xf32>
    %121 = arith.addf %119, %120 : vector<24x1xf32>
    %122 = math.rsqrt %121 : vector<24x1xf32>
    %123 = arith.mulf %116, %116 : vector<24x128xf32>
    %cst_73 = arith.constant dense<0.000000e+00> : vector<24xf32>
    %124 = vector.multi_reduction <add>, %123, %cst_73 [1] : vector<24x128xf32> to vector<24xf32>
    %125 = vector.shape_cast %124 : vector<24xf32> to vector<24x1xf32>
    %cst_74 = arith.constant 1.000000e-24 : f32
    %126 = vector.broadcast %cst_74 : f32 to vector<24x1xf32>
    %127 = arith.addf %125, %126 : vector<24x1xf32>
    %128 = math.rsqrt %127 : vector<24x1xf32>
    %129 = tpu.iota {dimensions = array<i32: 1>} : vector<24x256xi32>
    %c128_i32_75 = arith.constant 128 : i32
    %130 = vector.broadcast %c128_i32_75 : i32 to vector<24x256xi32>
    %131 = arith.cmpi slt, %129, %130 : vector<24x256xi32>
    %132 = vector.shape_cast %122 : vector<24x1xf32> to vector<24x1xf32>
    %133 = vector.broadcast %132 : vector<24x1xf32> to vector<24x256xf32>
    %134 = vector.shape_cast %128 : vector<24x1xf32> to vector<24x1xf32>
    %135 = vector.broadcast %134 : vector<24x1xf32> to vector<24x256xf32>
    %136 = arith.select %131, %133, %135 : vector<24x256xi1>, vector<24x256xf32>
    %137 = arith.mulf %91, %136 : vector<24x256xf32>
    %c0_76 = arith.constant 0 : index
    %c0_77 = arith.constant 0 : index
    %138 = vector.load %arg8[%c0_76, %c0_77] : memref<8x16xf32, #tpu.memory_space<vmem>>, vector<8x16xf32>
    %cst_78 = arith.constant dense<0.000000e+00> : vector<8x256xf32>
    %139 = tpu.matmul %138, %114, %cst_78 {dimension_numbers = #tpu.dot_dimension_numbers<[1], [0], [0], [1], [0, 0, 1, 1], [], []>} : vector<8x16xf32>, vector<16x256xf32>, vector<8x256xf32> -> vector<8x256xf32>
    %c0_79 = arith.constant 0 : index
    %c0_80 = arith.constant 0 : index
    %140 = vector.load %arg9[%c0_79, %c0_80] : memref<40x24xf32, #tpu.memory_space<vmem>>, vector<40x24xf32>
    %cst_81 = arith.constant dense<0.000000e+00> : vector<40x256xf32>
    %141 = tpu.matmul %140, %137, %cst_81 {dimension_numbers = #tpu.dot_dimension_numbers<[1], [0], [0], [1], [0, 0, 1, 1], [], []>} : vector<40x24xf32>, vector<24x256xf32>, vector<40x256xf32> -> vector<40x256xf32>
    %142 = vector.extract_strided_slice %139 {offsets = [0, 0], sizes = [8, 128], strides = [1, 1]} : vector<8x256xf32> to vector<8x128xf32>
    %143 = vector.extract_strided_slice %139 {offsets = [0, 128], sizes = [8, 128], strides = [1, 1]} : vector<8x256xf32> to vector<8x128xf32>
    %144 = vector.extract_strided_slice %141 {offsets = [0, 0], sizes = [8, 128], strides = [1, 1]} : vector<40x256xf32> to vector<8x128xf32>
    %145 = vector.extract_strided_slice %141 {offsets = [0, 128], sizes = [8, 128], strides = [1, 1]} : vector<40x256xf32> to vector<8x128xf32>
    %146 = vector.extract_strided_slice %141 {offsets = [8, 0], sizes = [32, 128], strides = [1, 1]} : vector<40x256xf32> to vector<32x128xf32>
    %cst_82 = arith.constant dense<0.000000e+00> : vector<8x8xf32>
    %147 = tpu.matmul %143, %142, %cst_82 {dimension_numbers = #tpu.dot_dimension_numbers<[1], [1], [0], [0], [0, 0, 1, 0], [], []>} : vector<8x128xf32>, vector<8x128xf32>, vector<8x8xf32> -> vector<8x8xf32>
    %cst_83 = arith.constant 5.000000e+00 : f32
    %148 = vector.broadcast %cst_83 : f32 to vector<8x8xf32>
    %149 = arith.mulf %147, %148 : vector<8x8xf32>
    %cst_84 = arith.constant dense<0.000000e+00> : vector<32x8xf32>
    %150 = tpu.matmul %146, %145, %cst_84 {dimension_numbers = #tpu.dot_dimension_numbers<[1], [1], [0], [0], [0, 0, 1, 0], [], []>} : vector<32x128xf32>, vector<8x128xf32>, vector<32x8xf32> -> vector<32x8xf32>
    %cst_85 = arith.constant 5.000000e+00 : f32
    %151 = vector.broadcast %cst_85 : f32 to vector<32x8xf32>
    %152 = arith.mulf %150, %151 : vector<32x8xf32>
    %cst_86 = arith.constant dense<0xFF800000> : vector<8xf32>
    %153 = vector.multi_reduction <maximumf>, %149, %cst_86 [1] : vector<8x8xf32> to vector<8xf32>
    %154 = vector.shape_cast %153 : vector<8xf32> to vector<8x1xf32>
    %cst_87 = arith.constant 0.000000e+00 : f32
    %155 = vector.broadcast %cst_87 : f32 to vector<8x1xf32>
    %156 = arith.maximumf %154, %155 : vector<8x1xf32>
    %157 = vector.broadcast %156 : vector<8x1xf32> to vector<8x8xf32>
    %158 = arith.subf %149, %157 : vector<8x8xf32>
    %159 = math.exp %158 : vector<8x8xf32>
    %cst_88 = arith.constant dense<0.000000e+00> : vector<8xf32>
    %160 = vector.multi_reduction <add>, %159, %cst_88 [1] : vector<8x8xf32> to vector<8xf32>
    %161 = vector.shape_cast %160 : vector<8xf32> to vector<8x1xf32>
    %cst_89 = arith.constant 0.000000e+00 : f32
    %162 = vector.broadcast %cst_89 : f32 to vector<8x1xf32>
    %163 = arith.subf %162, %156 : vector<8x1xf32>
    %164 = math.exp %163 : vector<8x1xf32>
    %cst_90 = arith.constant 9.99999993E-9 : f32
    %165 = vector.broadcast %cst_90 : f32 to vector<8x1xf32>
    %166 = arith.mulf %165, %164 : vector<8x1xf32>
    %167 = arith.addf %161, %166 : vector<8x1xf32>
    %168 = math.log %167 : vector<8x1xf32>
    %169 = arith.addf %156, %168 : vector<8x1xf32>
    %170 = vector.shape_cast %169 : vector<8x1xf32> to vector<1x8x1xf32>
    %cst_91 = arith.constant dense<0.000000e+00> : vector<1xf32>
    %171 = vector.multi_reduction <add>, %170, %cst_91 [1, 2] : vector<1x8x1xf32> to vector<1xf32>
    %172 = vector.shape_cast %171 : vector<1xf32> to vector<1x1x1xf32>
    %173 = vector.extract %172[0, 0, 0] : f32 from vector<1x1x1xf32>
    %cst_92 = arith.constant 8.000000e+00 : f32
    %174 = arith.divf %173, %cst_92 : f32
    %cst_93 = arith.constant dense<0xFF800000> : vector<32xf32>
    %175 = vector.multi_reduction <maximumf>, %152, %cst_93 [1] : vector<32x8xf32> to vector<32xf32>
    %176 = vector.shape_cast %175 : vector<32xf32> to vector<32x1xf32>
    %cst_94 = arith.constant 0.000000e+00 : f32
    %177 = vector.broadcast %cst_94 : f32 to vector<32x1xf32>
    %178 = arith.maximumf %176, %177 : vector<32x1xf32>
    %179 = vector.broadcast %178 : vector<32x1xf32> to vector<32x8xf32>
    %180 = arith.subf %152, %179 : vector<32x8xf32>
    %181 = math.exp %180 : vector<32x8xf32>
    %cst_95 = arith.constant dense<0.000000e+00> : vector<32xf32>
    %182 = vector.multi_reduction <add>, %181, %cst_95 [1] : vector<32x8xf32> to vector<32xf32>
    %183 = vector.shape_cast %182 : vector<32xf32> to vector<32x1xf32>
    %cst_96 = arith.constant 0.000000e+00 : f32
    %184 = vector.broadcast %cst_96 : f32 to vector<32x1xf32>
    %185 = arith.subf %184, %178 : vector<32x1xf32>
    %186 = math.exp %185 : vector<32x1xf32>
    %cst_97 = arith.constant 9.99999993E-9 : f32
    %187 = vector.broadcast %cst_97 : f32 to vector<32x1xf32>
    %188 = arith.mulf %187, %186 : vector<32x1xf32>
    %189 = arith.addf %183, %188 : vector<32x1xf32>
    %190 = math.log %189 : vector<32x1xf32>
    %191 = arith.addf %178, %190 : vector<32x1xf32>
    %192 = vector.shape_cast %191 : vector<32x1xf32> to vector<1x32x1xf32>
    %cst_98 = arith.constant dense<0.000000e+00> : vector<1xf32>
    %193 = vector.multi_reduction <add>, %192, %cst_98 [1, 2] : vector<1x32x1xf32> to vector<1xf32>
    %194 = vector.shape_cast %193 : vector<1xf32> to vector<1x1x1xf32>
    %195 = vector.extract %194[0, 0, 0] : f32 from vector<1x1x1xf32>
    %cst_99 = arith.constant 3.200000e+01 : f32
    %196 = arith.divf %195, %cst_99 : f32
    %197 = arith.addf %174, %196 : f32
    %198 = arith.mulf %143, %142 : vector<8x128xf32>
    %cst_100 = arith.constant dense<0.000000e+00> : vector<8xf32>
    %199 = vector.multi_reduction <add>, %198, %cst_100 [1] : vector<8x128xf32> to vector<8xf32>
    %200 = vector.shape_cast %199 : vector<8xf32> to vector<8x1xf32>
    %cst_101 = arith.constant 5.000000e+00 : f32
    %201 = vector.broadcast %cst_101 : f32 to vector<8x1xf32>
    %202 = arith.mulf %200, %201 : vector<8x1xf32>
    %cst_102 = arith.constant -1.000000e+00 : f32
    %cst_103 = arith.constant 1.000000e+00 : f32
    %203 = vector.broadcast %cst_102 : f32 to vector<8x1xf32>
    %204 = arith.maximumf %203, %202 : vector<8x1xf32>
    %205 = vector.broadcast %cst_103 : f32 to vector<8x1xf32>
    %206 = arith.minimumf %205, %204 : vector<8x1xf32>
    %207 = vector.shape_cast %206 : vector<8x1xf32> to vector<1x8x1xf32>
    %cst_104 = arith.constant dense<0.000000e+00> : vector<1xf32>
    %208 = vector.multi_reduction <add>, %207, %cst_104 [1, 2] : vector<1x8x1xf32> to vector<1xf32>
    %209 = vector.shape_cast %208 : vector<1xf32> to vector<1x1x1xf32>
    %210 = vector.extract %209[0, 0, 0] : f32 from vector<1x1x1xf32>
    %cst_105 = arith.constant 8.000000e+00 : f32
    %211 = arith.divf %210, %cst_105 : f32
    %212 = arith.mulf %145, %144 : vector<8x128xf32>
    %cst_106 = arith.constant dense<0.000000e+00> : vector<8xf32>
    %213 = vector.multi_reduction <add>, %212, %cst_106 [1] : vector<8x128xf32> to vector<8xf32>
    %214 = vector.shape_cast %213 : vector<8xf32> to vector<8x1xf32>
    %cst_107 = arith.constant 5.000000e+00 : f32
    %215 = vector.broadcast %cst_107 : f32 to vector<8x1xf32>
    %216 = arith.mulf %214, %215 : vector<8x1xf32>
    %cst_108 = arith.constant -1.000000e+00 : f32
    %cst_109 = arith.constant 1.000000e+00 : f32
    %217 = vector.broadcast %cst_108 : f32 to vector<8x1xf32>
    %218 = arith.maximumf %217, %216 : vector<8x1xf32>
    %219 = vector.broadcast %cst_109 : f32 to vector<8x1xf32>
    %220 = arith.minimumf %219, %218 : vector<8x1xf32>
    %221 = vector.shape_cast %220 : vector<8x1xf32> to vector<1x8x1xf32>
    %cst_110 = arith.constant dense<0.000000e+00> : vector<1xf32>
    %222 = vector.multi_reduction <add>, %221, %cst_110 [1, 2] : vector<1x8x1xf32> to vector<1xf32>
    %223 = vector.shape_cast %222 : vector<1xf32> to vector<1x1x1xf32>
    %224 = vector.extract %223[0, 0, 0] : f32 from vector<1x1x1xf32>
    %cst_111 = arith.constant 8.000000e+00 : f32
    %225 = arith.divf %224, %cst_111 : f32
    %226 = arith.addf %211, %225 : f32
    %227 = arith.subf %197, %226 : f32
    %cst_112 = arith.constant 2.000000e-01 : f32
    %228 = arith.mulf %227, %cst_112 : f32
    %cst_113 = arith.constant 0.000000e+00 : f32
    %229 = vector.broadcast %cst_113 : f32 to vector<1x128xf32>
    %230 = vector.broadcast %228 : f32 to vector<1x128xf32>
    %231 = arith.addf %229, %230 : vector<1x128xf32>
    %c0_114 = arith.constant 0 : index
    %c0_115 = arith.constant 0 : index
    %232 = vector.load %arg10[%c0_114, %c0_115] : memref<1x128xf32, #tpu.memory_space<vmem>>, vector<1x128xf32>
    tpu.vector_store %arg10[%c0_114, %c0_115], %231 {strides = array<i32>} : memref<1x128xf32, #tpu.memory_space<vmem>>, vector<1x128xf32>,
    return
  }
}

</mosaic_0001>

<llo_original>
// kernel: eq.29
$region0: #{eq.29}
  %s0 = inlined_call_operand.vmem [shape: s32[4,8], index: 0, kind: input, shape index: {}]
  %s1 = inlined_call_operand.vmem [shape: s32[32], index: 1, kind: output, shape index: {}]
  $region1: #{eq.29} parent=0
    #allocation0 [shape = 'u8[4096]{0}', space=vmem, size = 0x1000, scoped, tag = 'scoped mem for output reshape']
    #allocation1 [shape = 'u8[4096]{0}', space=vmem, size = 0x1000, scoped, tag = 'scoped mem for input reshape']
    %s3 = sshll.u32 1, 4
    %s4 = ssub.s32 %s3, 1
    %v5 = vld [vmem:[%s0] sm:%s4]
    %6 = vst [vmem:[#allocation1] sm:%s4] %v5
    %v7 = vld [vmem:[#allocation1] sm:$0x1]
    %vm8 = vcmask 64512
    %9 = vst.msk [vmem:[#allocation0] sm:$0x1] %vm8, %v7
    %s10 = scalar_lea.vmem [#allocation1], 3
    %v11 = vld [vmem:[%s10] sm:$0x1]
    %12 = vrot.lane.b32.xlu0 %v11, 24
    %v13 = vpop.permute.xlu0 %12
    %vm14 = vcmask 261312
    %15 = vst.msk [vmem:[#allocation0] sm:$0x1] %vm14, %v13
    %s16 = scalar_lea.vmem [#allocation1], 2
    %v17 = vld [vmem:[%s16] sm:$0x1]
    %18 = vrot.lane.b32.xlu0 %v17, 16
    %v19 = vpop.permute.xlu0 %18
    %vm20 = vcmask 195712
    %21 = vst.msk [vmem:[#allocation0] sm:$0x1] %vm20, %v19
    %s22 = scalar_lea.vmem [#allocation1], 1
    %v23 = vld [vmem:[%s22] sm:$0x1]
    %24 = vrot.lane.b32.xlu0 %v23, 8
    %v25 = vpop.permute.xlu0 %24
    %vm26 = vcmask 130112
    %27 = vst.msk [vmem:[#allocation0] sm:$0x1] %vm26, %v25
    %s29 = sshll.u32 1, 1
    %s30 = ssub.s32 %s29, 1
    %v32 = vld [vmem:[#allocation0] sm:%s30]
    %s33 = sshll.u32 1, 1
    %s34 = ssub.s32 %s33, 1
    %35 = vst [vmem:[%s1] sm:%s34] %v32

// kernel: top_hicl_forward.1
$region0: #{top_hicl_forward.1}
  #allocation0 [shape = 'u32[]', space=smem, size = 0x4, offset = 0x4, fixed_abs, tag = 'smem constant byte address 0x4 - core index']
  #allocation1 [shape = 'u32[144,128]{1,0:T(1,128)}', space=vmem, size = 0x12000, scoped, tag = 'internal scratch']
  %s0 = inlined_call_operand.hbm [shape: bf16[16,24], index: 0, kind: input, shape index: {}]
  %s1 = inlined_call_operand.vmem [shape: bf16[24,16], index: 1, kind: input, shape index: {}]
  %s2 = inlined_call_operand.vmem [shape: f32[16,256], index: 2, kind: input, shape index: {}]
  %s3 = inlined_call_operand.hbm [shape: f32[24,256], index: 3, kind: input, shape index: {}]
  %s4 = inlined_call_operand.vmem [shape: bf16[2,2,32,128], index: 4, kind: input, shape index: {}]
  %s5 = inlined_call_operand.hbm [shape: bf16[2,2,32,128], index: 5, kind: input, shape index: {}]
  %s6 = inlined_call_operand.hbm [shape: f32[2,1,256], index: 6, kind: input, shape index: {}]
  %s7 = inlined_call_operand.hbm [shape: f32[2,1,256], index: 7, kind: input, shape index: {}]
  %s8 = inlined_call_operand.vmem [shape: f32[8,16], index: 8, kind: input, shape index: {}]
  %s9 = inlined_call_operand.vmem [shape: f32[40,24], index: 9, kind: input, shape index: {}]
  %s10 = inlined_call_operand.vmem [shape: f32[1,128], index: 10, kind: output, shape index: {}]
  %s11 = sld [smem:[#allocation0]]
  $region70: #{top_hicl_forward.1} parent=0
    _
  %s13 = ssub.s32 1, %s11
  %s14 = scalar_select 0, %s13, %s11
  $region1: #{top_hicl_forward.1} parent=0
    #allocation2 [shape = 'u8[4096]{0}', space=vmem, size = 0x1000, scoped, tag = 'input window, operand 0, single buffered']
    #allocation3 [shape = 's32[1]{0}', space=sflag, size = 0x4, scoped, tag = 'scoped memory for top_hicl_forward.1']
    #allocation4 [shape = 'u8[24576]{0}', space=vmem, size = 0x6000, scoped, tag = 'input window, operand 3, single buffered']
    #allocation5 [shape = 's32[1]{0}', space=sflag, size = 0x4, scoped, tag = 'scoped memory for top_hicl_forward.1']
    #allocation6 [shape = 'u8[32768]{0}', space=vmem, size = 0x8000, scoped, tag = 'input window, operand 5, single buffered']
    #allocation7 [shape = 'u8[2048]{0}', space=vmem, size = 0x800, scoped, tag = 'input window, operand 6, single buffered']
    #allocation8 [shape = 's32[1]{0}', space=sflag, size = 0x4, scoped, tag = 'scoped memory for top_hicl_forward.1']
    #allocation9 [shape = 'u8[2048]{0}', space=vmem, size = 0x800, scoped, tag = 'input window, operand 7, single buffered']
    %15 = vsyncpa [#allocation3], 0
    %16 = vsyncpa [#allocation5], 0
    %17 = vsyncpa [#allocation8], 0
    // Predicated region
    $region2: #{top_hicl_forward.1} parent=1 // pred_check
      _
    $region3: #{top_hicl_forward.1} parent=1 // pred_check_branch
      %19 = sbr.rel (0) target = $region5
    $region4: #{top_hicl_forward.1} parent=1 // pred_region
      %s21 = ssub.s32 128, 128
      %22 = vsyncadd [#allocation3], %s21
      %s23 = sshll.u32 [#allocation2], 4
      %s24 = int_to_ptr.vmem [resolvable:$true] %s23
      %29 = dma.hbm_to_vmem [thread:$0]  %s0, 128, %s24, [#allocation3], 64, 64, 4
    $region5: #{top_hicl_forward.1} parent=1 // pred_fallthru
      _
    // Predicated region
    $region6: #{top_hicl_forward.1} parent=1 // pred_check
      _
    $region7: #{top_hicl_forward.1} parent=1 // pred_check_branch
      %31 = sbr.rel (0) target = $region9
    $region8: #{top_hicl_forward.1} parent=1 // pred_region
      _
    $region9: #{top_hicl_forward.1} parent=1 // pred_fallthru
      _
    // Predicated region
    $region10: #{top_hicl_forward.1} parent=1 // pred_check
      _
    $region11: #{top_hicl_forward.1} parent=1 // pred_check_branch
      %33 = sbr.rel (0) target = $region13
    $region12: #{top_hicl_forward.1} parent=1 // pred_region
      _
    $region13: #{top_hicl_forward.1} parent=1 // pred_fallthru
      _
    // Predicated region
    $region14: #{top_hicl_forward.1} parent=1 // pred_check
      _
    $region15: #{top_hicl_forward.1} parent=1 // pred_check_branch
      %35 = sbr.rel (0) target = $region17
    $region16: #{top_hicl_forward.1} parent=1 // pred_region
      %s37 = ssub.s32 768, 768
      %38 = vsyncadd [#allocation5], %s37
      %s39 = sshll.u32 [#allocation4], 4
      %s40 = int_to_ptr.vmem [resolvable:$true] %s39
      %45 = dma.hbm_to_vmem [thread:$0]  %s3, 768, %s40, [#allocation5], 256, 256, 16
    $region17: #{top_hicl_forward.1} parent=1 // pred_fallthru
      _
    // Predicated region
    $region18: #{top_hicl_forward.1} parent=1 // pred_check
      _
    $region19: #{top_hicl_forward.1} parent=1 // pred_check_branch
      %47 = sbr.rel (0) target = $region21
    $region20: #{top_hicl_forward.1} parent=1 // pred_region
      _
    $region21: #{top_hicl_forward.1} parent=1 // pred_fallthru
      _
    // Predicated region
    $region22: #{top_hicl_forward.1} parent=1 // pred_check
      _
    $region23: #{top_hicl_forward.1} parent=1 // pred_check_branch
      %49 = sbr.rel (0) target = $region25
    $region24: #{top_hicl_forward.1} parent=1 // pred_region
      %s51 = ssub.s32 1024, 1024
      %52 = vsyncadd [#allocation5], %s51
      %s53 = sshll.u32 [#allocation6], 4
      %s54 = int_to_ptr.vmem [resolvable:$true] %s53
      %59 = dma.hbm_to_vmem [thread:$0]  %s5, 1024, %s54, [#allocation5], 64, 64, 4
    $region25: #{top_hicl_forward.1} parent=1 // pred_fallthru
      _
    // Predicated region
    $region26: #{top_hicl_forward.1} parent=1 // pred_check
      _
    $region27: #{top_hicl_forward.1} parent=1 // pred_check_branch
      %61 = sbr.rel (0) target = $region29
    $region28: #{top_hicl_forward.1} parent=1 // pred_region
      %s63 = ssub.s32 64, 64
      %64 = vsyncadd [#allocation8], %s63
      %s65 = sshll.u32 [#allocation7], 4
      %s66 = int_to_ptr.vmem [resolvable:$true] %s65
      %71 = dma.hbm_to_vmem [thread:$0]  %s6, 64, %s66, [#allocation8], 32, 32, 2
    $region29: #{top_hicl_forward.1} parent=1 // pred_fallthru
      _
    // Predicated region
    $region30: #{top_hicl_forward.1} parent=1 // pred_check
      _
    $region31: #{top_hicl_forward.1} parent=1 // pred_check_branch
      %73 = sbr.rel (0) target = $region33
    $region32: #{top_hicl_forward.1} parent=1 // pred_region
      %s75 = ssub.s32 64, 64
      %76 = vsyncadd [#allocation8], %s75
      %s77 = sshll.u32 [#allocation9], 4
      %s78 = int_to_ptr.vmem [resolvable:$true] %s77
      %83 = dma.hbm_to_vmem [thread:$0]  %s7, 64, %s78, [#allocation8], 32, 32, 2
    $region33: #{top_hicl_forward.1} parent=1 // pred_fallthru
      _
    // Predicated region
    $region34: #{top_hicl_forward.1} parent=1 // pred_check
      _
    $region35: #{top_hicl_forward.1} parent=1 // pred_check_branch
      %85 = sbr.rel (0) target = $region37
    $region36: #{top_hicl_forward.1} parent=1 // pred_region
      _
    $region37: #{top_hicl_forward.1} parent=1 // pred_fallthru
      _
    // Predicated region
    $region38: #{top_hicl_forward.1} parent=1 // pred_check
      _
    $region39: #{top_hicl_forward.1} parent=1 // pred_check_branch
      %87 = sbr.rel (0) target = $region41
    $region40: #{top_hicl_forward.1} parent=1 // pred_region
      _
    $region41: #{top_hicl_forward.1} parent=1 // pred_fallthru
      _
    // Predicated region
    $region42: #{top_hicl_forward.1} parent=1 // pred_check
      _
    $region43: #{top_hicl_forward.1} parent=1 // pred_check_branch
      %89 = sbr.rel (0) target = $region45
    $region44: #{top_hicl_forward.1} parent=1 // pred_region
      %90 = dma.done [#allocation3], 128
    $region45: #{top_hicl_forward.1} parent=1 // pred_fallthru
      _
    // Predicated region
    $region46: #{top_hicl_forward.1} parent=1 // pred_check
      _
    $region47: #{top_hicl_forward.1} parent=1 // pred_check_branch
      %92 = sbr.rel (0) target = $region49
    $region48: #{top_hicl_forward.1} parent=1 // pred_region
      %93 = dma.done [#allocation5], 768
    $region49: #{top_hicl_forward.1} parent=1 // pred_fallthru
      _
    // Predicated region
    $region50: #{top_hicl_forward.1} parent=1 // pred_check
      _
    $region51: #{top_hicl_forward.1} parent=1 // pred_check_branch
      %95 = sbr.rel (0) target = $region53
    $region52: #{top_hicl_forward.1} parent=1 // pred_region
      %96 = dma.done [#allocation5], 1024
    $region53: #{top_hicl_forward.1} parent=1 // pred_fallthru
      _
    // Predicated region
    $region54: #{top_hicl_forward.1} parent=1 // pred_check
      _
    $region55: #{top_hicl_forward.1} parent=1 // pred_check_branch
      %98 = sbr.rel (0) target = $region57
    $region56: #{top_hicl_forward.1} parent=1 // pred_region
      %99 = dma.done [#allocation8], 64
    $region57: #{top_hicl_forward.1} parent=1 // pred_fallthru
      _
    // Predicated region
    $region58: #{top_hicl_forward.1} parent=1 // pred_check
      _
    $region59: #{top_hicl_forward.1} parent=1 // pred_check_branch
      %101 = sbr.rel (0) target = $region61
    $region60: #{top_hicl_forward.1} parent=1 // pred_region
      %102 = dma.done [#allocation8], 64
    $region61: #{top_hicl_forward.1} parent=1 // pred_fallthru
      _
    %v104 = vld [vmem:[#allocation2] sm:$0xf]
    %v105 = vld [vmem:[#allocation2 + $0x4] sm:$0xf]
    %v106 = vld [vmem:[%s1] sm:$0xf]
    %v107 = vld [vmem:[%s1 + $0x4] sm:$0xf]
    %v108 = vld [vmem:[%s1 + $0x8] sm:$0xf]
    %v109 = vld [vmem:[%s2] sm:$0xff]
    %v110 = vld [vmem:[%s2 + $0x8] sm:$0xff]
    %v111 = vld [vmem:[%s2 + $0x10] sm:$0xff]
    %v112 = vld [vmem:[%s2 + $0x18] sm:$0xff]
    %v113 = vld [vmem:[#allocation4] sm:$0xff]
    %v114 = vld [vmem:[#allocation4 + $0x8] sm:$0xff]
    %v115 = vld [vmem:[#allocation4 + $0x10] sm:$0xff]
    %v116 = vld [vmem:[#allocation4 + $0x18] sm:$0xff]
    %v117 = vld [vmem:[#allocation4 + $0x20] sm:$0xff]
    %v118 = vld [vmem:[#allocation4 + $0x28] sm:$0xff]
    %v119 = vld [vmem:[#allocation7] sm:$0x3]
    %v120 = vld [vmem:[#allocation9] sm:$0x3]
    %v121 = vpack.c.bf16 %v115, %v113
    %v122 = vpack.c.bf16 %v116, %v114
    %v123 = vpack.c.bf16 %v117, %v117
    %v124 = vpack.c.bf16 %v118, %v118
    %v127 = vunpack.c.l.b16 %v104
    %v128 = vunpack.c.l.b16 %v105
    %v129 = vpack.c.b16 %v128, %v127
    %vm130 = vcmask 195584
    %v132 = vsel %vm130, %v129, 0
    %vm134 = vcmask 1043456
    %v136 = vsel %vm134, %v123, 0
    %v139 = vsel %vm134, %v124, 0
    %141 = vmatprep.subr.bf16.mxu0 0
    %142 = vmatpush1.bf16.msra.mxu0 0
    %143 = vmatprep.subr.bf16.mxu0 0
    %144 = vmatpush1.bf16.msra.mxu0 0
    %145 = vmatprep.subr.bf16.mxu0 0
    %146 = vmatpush1.bf16.msra.mxu0 0
    %147 = vmatprep.subr.bf16.mxu0 0
    %148 = vmatpush1.bf16.msra.mxu0 0
    %149 = vmatprep.subr.bf16.mxu0 0
    %150 = vmatpush1.bf16.msra.mxu0 0
    %151 = vmatprep.subr.bf16.mxu0 0
    %152 = vmatpush1.bf16.msra.mxu0 0
    %153 = vmatprep.subr.bf16.mxu0 %v139
    %154 = vmatpush1.bf16.msra.mxu0 %v136
    %155 = vmatprep.subr.bf16.mxu0 %v122
    %156 = vmatpush1.bf16.msra.mxu0 %v121
    %157 = vmatprep.subr.bf16.mxu0 0
    %158 = vmatpush2.bf16.msra.mxu0 0
    %159 = vmatprep.subr.bf16.mxu0 0
    %160 = vmatpush2.bf16.msra.mxu0 0
    %161 = vmatprep.subr.bf16.mxu0 0
    %162 = vmatpush2.bf16.msra.mxu0 0
    %163 = vmatprep.subr.bf16.mxu0 0
    %164 = vmatpush2.bf16.msra.mxu0 0
    %165 = vmatprep.subr.bf16.mxu0 0
    %166 = vmatpush2.bf16.msra.mxu0 0
    %167 = vmatprep.subr.bf16.mxu0 0
    %168 = vmatpush2.bf16.msra.mxu0 0
    %169 = vmatprep.subr.bf16.mxu0 0
    %170 = vmatpush2.bf16.msra.mxu0 0
    %171 = vmatprep.subr.bf16.mxu0 0
    %172 = vmatpush2.bf16.msra.mxu0 0
    %173 = vmatprep.mubr.bf16.mxu0 0
    %174 = vmatmul.mubr.bf16.gmra.mxu0 %v132
    %v175 = vpop.f32.mrf.mxu0
    %v176 = vadd.f32 0.0, %v175
    %v177 = vpop.f32.mrf.mxu0
    %v178 = vadd.f32 0.0, %v177
    %v179 = vpop.f32.mrf.mxu0
    %v180 = vadd.f32 0.0, %v179
    %v181 = vpop.f32.mrf.mxu0
    %v182 = vadd.f32 0.0, %v181
    %183 = vdwg.mxu0
    %v184 = vpack.c.bf16 %v111, %v109
    %v185 = vpack.c.bf16 %v112, %v110
    %v189 = vunpack.c.l.b16 %v106
    %v190 = vunpack.c.l.b16 %v107
    %v191 = vunpack.c.l.b16 %v108
    %v192 = vpack.c.b16 %v190, %v189
    %v193 = vpack.c.b16 %v191, %v191
    %vm194 = vcmask 130048
    %v196 = vsel %vm194, %v192, 0
    %v199 = vsel %vm194, %v193, 0
    %201 = vmatprep.subr.bf16.mxu0 0
    %202 = vmatpush1.bf16.msra.mxu0 0
    %203 = vmatprep.subr.bf16.mxu0 0
    %204 = vmatpush1.bf16.msra.mxu0 0
    %205 = vmatprep.subr.bf16.mxu0 0
    %206 = vmatpush1.bf16.msra.mxu0 0
    %207 = vmatprep.subr.bf16.mxu0 0
    %208 = vmatpush1.bf16.msra.mxu0 0
    %209 = vmatprep.subr.bf16.mxu0 0
    %210 = vmatpush1.bf16.msra.mxu0 0
    %211 = vmatprep.subr.bf16.mxu0 0
    %212 = vmatpush1.bf16.msra.mxu0 0
    %213 = vmatprep.subr.bf16.mxu0 0
    %214 = vmatpush1.bf16.msra.mxu0 0
    %215 = vmatprep.subr.bf16.mxu0 %v185
    %216 = vmatpush1.bf16.msra.mxu0 %v184
    %217 = vmatprep.subr.bf16.mxu0 0
    %218 = vmatpush2.bf16.msra.mxu0 0
    %219 = vmatprep.subr.bf16.mxu0 0
    %220 = vmatpush2.bf16.msra.mxu0 0
    %221 = vmatprep.subr.bf16.mxu0 0
    %222 = vmatpush2.bf16.msra.mxu0 0
    %223 = vmatprep.subr.bf16.mxu0 0
    %224 = vmatpush2.bf16.msra.mxu0 0
    %225 = vmatprep.subr.bf16.mxu0 0
    %226 = vmatpush2.bf16.msra.mxu0 0
    %227 = vmatprep.subr.bf16.mxu0 0
    %228 = vmatpush2.bf16.msra.mxu0 0
    %229 = vmatprep.subr.bf16.mxu0 0
    %230 = vmatpush2.bf16.msra.mxu0 0
    %231 = vmatprep.subr.bf16.mxu0 0
    %232 = vmatpush2.bf16.msra.mxu0 0
    %233 = vmatprep.mubr.bf16.mxu0 0
    %234 = vmatmul.mubr.bf16.gmra.mxu0 %v196
    %v235 = vpop.f32.mrf.mxu0
    %v236 = vadd.f32 0.0, %v235
    %v237 = vpop.f32.mrf.mxu0
    %v238 = vadd.f32 0.0, %v237
    %v239 = vpop.f32.mrf.mxu0
    %v240 = vadd.f32 0.0, %v239
    %v241 = vpop.f32.mrf.mxu0
    %v242 = vadd.f32 0.0, %v241
    %243 = vmatprep.mubr.bf16.mxu0 0
    %244 = vmatmul.mubr.bf16.gmra.mxu0 %v199
    %v245 = vpop.f32.mrf.mxu0
    %v246 = vadd.f32 0.0, %v245
    %v247 = vpop.f32.mrf.mxu0
    %v248 = vadd.f32 0.0, %v247
    %v249 = vpop.f32.mrf.mxu0
    %v250 = vpop.f32.mrf.mxu0
    %251 = vdwg.mxu0
    %v252 = vpack.c.bf16 %v180, %v176
    %v253 = vpack.c.bf16 %v182, %v178
    %v254 = vld [vmem:[%s4] sm:$0xf]
    %v255 = vld [vmem:[%s4 + $0x4] sm:$0xf]
    %v256 = vld [vmem:[%s4 + $0x8] sm:$0xf]
    %v257 = vld [vmem:[%s4 + $0xc] sm:$0xf]
    %v262 = vunpack.c.l.b16 %v254
    %v263 = vunpack.c.l.b16 %v255
    %v264 = vunpack.c.l.b16 %v256
    %v265 = vunpack.c.l.b16 %v257
    %v266 = vpack.c.b16 %v263, %v262
    %v267 = vpack.c.b16 %v265, %v264
    %vm270 = vcmask 261120
    %v272 = vsel %vm270, %v252, 0
    %274 = vmatprep.subr.bf16.mxu0 0
    %275 = vmatpush1.bf16.msra.mxu0 0
    %276 = vmatprep.subr.bf16.mxu0 0
    %277 = vmatpush1.bf16.msra.mxu0 0
    %278 = vmatprep.subr.bf16.mxu0 0
    %279 = vmatpush1.bf16.msra.mxu0 0
    %280 = vmatprep.subr.bf16.mxu0 0
    %281 = vmatpush1.bf16.msra.mxu0 0
    %282 = vmatprep.subr.bf16.mxu0 0
    %283 = vmatpush1.bf16.msra.mxu0 0
    %284 = vmatprep.subr.bf16.mxu0 0
    %285 = vmatpush1.bf16.msra.mxu0 0
    %286 = vmatprep.subr.bf16.mxu0 0
    %287 = vmatpush1.bf16.msra.mxu0 %v267
    %288 = vmatprep.subr.bf16.mxu0 0
    %289 = vmatpush1.bf16.msra.mxu0 %v266
    %290 = vmatprep.subr.bf16.mxu0 0
    %291 = vmatpush2.bf16.msra.mxu0 0
    %292 = vmatprep.subr.bf16.mxu0 0
    %293 = vmatpush2.bf16.msra.mxu0 0
    %294 = vmatprep.subr.bf16.mxu0 0
    %295 = vmatpush2.bf16.msra.mxu0 0
    %296 = vmatprep.subr.bf16.mxu0 0
    %297 = vmatpush2.bf16.msra.mxu0 0
    %298 = vmatprep.subr.bf16.mxu0 0
    %299 = vmatpush2.bf16.msra.mxu0 0
    %300 = vmatprep.subr.bf16.mxu0 0
    %301 = vmatpush2.bf16.msra.mxu0 0
    %302 = vmatprep.subr.bf16.mxu0 0
    %303 = vmatpush2.bf16.msra.mxu0 0
    %304 = vmatprep.subr.bf16.mxu0 0
    %305 = vmatpush2.bf16.msra.mxu0 0
    %306 = vmatprep.mubr.bf16.mxu0 0
    %307 = vmatmul.mubr.bf16.gmra.mxu0 %v272
    %v308 = vpop.f32.mrf.mxu0
    %v309 = vadd.f32 0.0, %v308
    %v310 = vpop.f32.mrf.mxu0
    %v311 = vpop.f32.mrf.mxu0
    %v312 = vadd.f32 0.0, %v311
    %v313 = vpop.f32.mrf.mxu0
    %314 = vdwg.mxu0
    %s315 = scalar_lea.vmem %s4, 16
    %v316 = vld [vmem:[%s315] sm:$0xf]
    %v317 = vld [vmem:[%s315 + $0x4] sm:$0xf]
    %v318 = vld [vmem:[%s315 + $0x8] sm:$0xf]
    %v319 = vld [vmem:[%s315 + $0xc] sm:$0xf]
    %v324 = vunpack.c.l.b16 %v316
    %v325 = vunpack.c.l.b16 %v317
    %v326 = vunpack.c.l.b16 %v318
    %v327 = vunpack.c.l.b16 %v319
    %v328 = vpack.c.b16 %v325, %v324
    %v329 = vpack.c.b16 %v327, %v326
    %v333 = vsel %vm270, %v253, 0
    %335 = vmatprep.subr.bf16.mxu0 0
    %336 = vmatpush1.bf16.msra.mxu0 0
    %337 = vmatprep.subr.bf16.mxu0 0
    %338 = vmatpush1.bf16.msra.mxu0 0
    %339 = vmatprep.subr.bf16.mxu0 0
    %340 = vmatpush1.bf16.msra.mxu0 0
    %341 = vmatprep.subr.bf16.mxu0 0
    %342 = vmatpush1.bf16.msra.mxu0 0
    %343 = vmatprep.subr.bf16.mxu0 0
    %344 = vmatpush1.bf16.msra.mxu0 0
    %345 = vmatprep.subr.bf16.mxu0 0
    %346 = vmatpush1.bf16.msra.mxu0 0
    %347 = vmatprep.subr.bf16.mxu0 0
    %348 = vmatpush1.bf16.msra.mxu0 %v329
    %349 = vmatprep.subr.bf16.mxu0 0
    %350 = vmatpush1.bf16.msra.mxu0 %v328
    %351 = vmatprep.subr.bf16.mxu0 0
    %352 = vmatpush2.bf16.msra.mxu0 0
    %353 = vmatprep.subr.bf16.mxu0 0
    %354 = vmatpush2.bf16.msra.mxu0 0
    %355 = vmatprep.subr.bf16.mxu0 0
    %356 = vmatpush2.bf16.msra.mxu0 0
    %357 = vmatprep.subr.bf16.mxu0 0
    %358 = vmatpush2.bf16.msra.mxu0 0
    %359 = vmatprep.subr.bf16.mxu0 0
    %360 = vmatpush2.bf16.msra.mxu0 0
    %361 = vmatprep.subr.bf16.mxu0 0
    %362 = vmatpush2.bf16.msra.mxu0 0
    %363 = vmatprep.subr.bf16.mxu0 0
    %364 = vmatpush2.bf16.msra.mxu0 0
    %365 = vmatprep.subr.bf16.mxu0 0
    %366 = vmatpush2.bf16.msra.mxu0 0
    %367 = vmatprep.mubr.bf16.mxu0 0
    %368 = vmatmul.mubr.bf16.gmra.mxu0 %v333
    %v369 = vpop.f32.mrf.mxu0
    %v370 = vadd.f32 0.0, %v369
    %v371 = vpop.f32.mrf.mxu0
    %v372 = vpop.f32.mrf.mxu0
    %v373 = vadd.f32 0.0, %v372
    %v374 = vpop.f32.mrf.mxu0
    %375 = vdwg.mxu0
    %v377 = vlaneseq
    %v378 = vshrl.u32 %v377, 7
    %v379 = vsub.s32 0, %v378
    %v380 = vrot.slane %v119, %v379
    %v381 = vlaneseq
    %v382 = vshrl.u32 %v381, 7
    %v383 = vsub.s32 1, %v382
    %v384 = vrot.slane %v119, %v383
    %v387 = vadd.f32 %v309, %v380
    %v388 = vadd.f32 %v370, %v384
    %v389 = vadd.f32 %v312, %v380
    %v390 = vadd.f32 %v373, %v384
    %v391 = vmax.f32 %v387, 0.0
    %v392 = vmax.f32 %v388, 0.0
    %v393 = vmax.f32 %v389, 0.0
    %v394 = vmax.f32 %v390, 0.0
    %v395 = vadd.f32 %v109, %v391
    %v396 = vadd.f32 %v110, %v392
    %v397 = vadd.f32 %v111, %v393
    %v398 = vadd.f32 %v112, %v394
    %v399 = vpack.c.bf16 %v240, %v236
    %v400 = vpack.c.bf16 %v246, %v246
    %v401 = vpack.c.bf16 %v242, %v238
    %v402 = vpack.c.bf16 %v248, %v248
    %v403 = vld [vmem:[#allocation6] sm:$0xf]
    %v404 = vld [vmem:[#allocation6 + $0x4] sm:$0xf]
    %v405 = vld [vmem:[#allocation6 + $0x8] sm:$0xf]
    %v406 = vld [vmem:[#allocation6 + $0xc] sm:$0xf]
    %v411 = vunpack.c.l.b16 %v403
    %v412 = vunpack.c.l.b16 %v404
    %v413 = vunpack.c.l.b16 %v405
    %v414 = vunpack.c.l.b16 %v406
    %v415 = vpack.c.b16 %v412, %v411
    %v416 = vpack.c.b16 %v414, %v413
    %v420 = vsel %vm270, %v399, 0
    %v423 = vsel %vm270, %v400, 0
    %425 = vmatprep.subr.bf16.mxu0 0
    %426 = vmatpush1.bf16.msra.mxu0 0
    %427 = vmatprep.subr.bf16.mxu0 0
    %428 = vmatpush1.bf16.msra.mxu0 0
    %429 = vmatprep.subr.bf16.mxu0 0
    %430 = vmatpush1.bf16.msra.mxu0 0
    %431 = vmatprep.subr.bf16.mxu0 0
    %432 = vmatpush1.bf16.msra.mxu0 0
    %433 = vmatprep.subr.bf16.mxu0 0
    %434 = vmatpush1.bf16.msra.mxu0 0
    %435 = vmatprep.subr.bf16.mxu0 0
    %436 = vmatpush1.bf16.msra.mxu0 0
    %437 = vmatprep.subr.bf16.mxu0 0
    %438 = vmatpush1.bf16.msra.mxu0 %v416
    %439 = vmatprep.subr.bf16.mxu0 0
    %440 = vmatpush1.bf16.msra.mxu0 %v415
    %441 = vmatprep.subr.bf16.mxu0 0
    %442 = vmatpush2.bf16.msra.mxu0 0
    %443 = vmatprep.subr.bf16.mxu0 0
    %444 = vmatpush2.bf16.msra.mxu0 0
    %445 = vmatprep.subr.bf16.mxu0 0
    %446 = vmatpush2.bf16.msra.mxu0 0
    %447 = vmatprep.subr.bf16.mxu0 0
    %448 = vmatpush2.bf16.msra.mxu0 0
    %449 = vmatprep.subr.bf16.mxu0 0
    %450 = vmatpush2.bf16.msra.mxu0 0
    %451 = vmatprep.subr.bf16.mxu0 0
    %452 = vmatpush2.bf16.msra.mxu0 0
    %453 = vmatprep.subr.bf16.mxu0 0
    %454 = vmatpush2.bf16.msra.mxu0 0
    %455 = vmatprep.subr.bf16.mxu0 0
    %456 = vmatpush2.bf16.msra.mxu0 0
    %457 = vmatprep.mubr.bf16.mxu0 0
    %458 = vmatmul.mubr.bf16.gmra.mxu0 %v420
    %v459 = vpop.f32.mrf.mxu0
    %v460 = vadd.f32 0.0, %v459
    %v461 = vpop.f32.mrf.mxu0
    %v462 = vpop.f32.mrf.mxu0
    %v463 = vadd.f32 0.0, %v462
    %v464 = vpop.f32.mrf.mxu0
    %465 = vmatprep.mubr.bf16.mxu0 0
    %466 = vmatmul.mubr.bf16.gmra.mxu0 %v423
    %v467 = vpop.f32.mrf.mxu0
    %v468 = vadd.f32 0.0, %v467
    %v469 = vpop.f32.mrf.mxu0
    %v470 = vpop.f32.mrf.mxu0
    %v471 = vpop.f32.mrf.mxu0
    %472 = vdwg.mxu0
    %s473 = scalar_lea.vmem [#allocation6], 16
    %v474 = vld [vmem:[%s473] sm:$0xf]
    %v475 = vld [vmem:[%s473 + $0x4] sm:$0xf]
    %v476 = vld [vmem:[%s473 + $0x8] sm:$0xf]
    %v477 = vld [vmem:[%s473 + $0xc] sm:$0xf]
    %v482 = vunpack.c.l.b16 %v474
    %v483 = vunpack.c.l.b16 %v475
    %v484 = vunpack.c.l.b16 %v476
    %v485 = vunpack.c.l.b16 %v477
    %v486 = vpack.c.b16 %v483, %v482
    %v487 = vpack.c.b16 %v485, %v484
    %v491 = vsel %vm270, %v401, 0
    %v494 = vsel %vm270, %v402, 0
    %496 = vmatprep.subr.bf16.mxu0 0
    %497 = vmatpush1.bf16.msra.mxu0 0
    %498 = vmatprep.subr.bf16.mxu0 0
    %499 = vmatpush1.bf16.msra.mxu0 0
    %500 = vmatprep.subr.bf16.mxu0 0
    %501 = vmatpush1.bf16.msra.mxu0 0
    %502 = vmatprep.subr.bf16.mxu0 0
    %503 = vmatpush1.bf16.msra.mxu0 0
    %504 = vmatprep.subr.bf16.mxu0 0
    %505 = vmatpush1.bf16.msra.mxu0 0
    %506 = vmatprep.subr.bf16.mxu0 0
    %507 = vmatpush1.bf16.msra.mxu0 0
    %508 = vmatprep.subr.bf16.mxu0 0
    %509 = vmatpush1.bf16.msra.mxu0 %v487
    %510 = vmatprep.subr.bf16.mxu0 0
    %511 = vmatpush1.bf16.msra.mxu0 %v486
    %512 = vmatprep.subr.bf16.mxu0 0
    %513 = vmatpush2.bf16.msra.mxu0 0
    %514 = vmatprep.subr.bf16.mxu0 0
    %515 = vmatpush2.bf16.msra.mxu0 0
    %516 = vmatprep.subr.bf16.mxu0 0
    %517 = vmatpush2.bf16.msra.mxu0 0
    %518 = vmatprep.subr.bf16.mxu0 0
    %519 = vmatpush2.bf16.msra.mxu0 0
    %520 = vmatprep.subr.bf16.mxu0 0
    %521 = vmatpush2.bf16.msra.mxu0 0
    %522 = vmatprep.subr.bf16.mxu0 0
    %523 = vmatpush2.bf16.msra.mxu0 0
    %524 = vmatprep.subr.bf16.mxu0 0
    %525 = vmatpush2.bf16.msra.mxu0 0
    %526 = vmatprep.subr.bf16.mxu0 0
    %527 = vmatpush2.bf16.msra.mxu0 0
    %528 = vmatprep.mubr.bf16.mxu0 0
    %529 = vmatmul.mubr.bf16.gmra.mxu0 %v491
    %v530 = vpop.f32.mrf.mxu0
    %v531 = vadd.f32 0.0, %v530
    %v532 = vpop.f32.mrf.mxu0
    %v533 = vpop.f32.mrf.mxu0
    %v534 = vadd.f32 0.0, %v533
    %v535 = vpop.f32.mrf.mxu0
    %536 = vmatprep.mubr.bf16.mxu0 0
    %537 = vmatmul.mubr.bf16.gmra.mxu0 %v494
    %v538 = vpop.f32.mrf.mxu0
    %v539 = vadd.f32 0.0, %v538
    %v540 = vpop.f32.mrf.mxu0
    %v541 = vpop.f32.mrf.mxu0
    %v542 = vpop.f32.mrf.mxu0
    %543 = vdwg.mxu0
    %v545 = vlaneseq
    %v546 = vshrl.u32 %v545, 7
    %v547 = vsub.s32 0, %v546
    %v548 = vrot.slane %v120, %v547
    %v549 = vlaneseq
    %v550 = vshrl.u32 %v549, 7
    %v551 = vsub.s32 1, %v550
    %v552 = vrot.slane %v120, %v551
    %v555 = vadd.f32 %v460, %v548
    %v556 = vadd.f32 %v531, %v552
    %v557 = vadd.f32 %v463, %v548
    %v558 = vadd.f32 %v534, %v552
    %v559 = vadd.f32 %v468, %v548
    %v560 = vadd.f32 %v539, %v552
    %v561 = vmax.f32 %v555, 0.0
    %v562 = vmax.f32 %v556, 0.0
    %v563 = vmax.f32 %v557, 0.0
    %v564 = vmax.f32 %v558, 0.0
    %v565 = vmax.f32 %v559, 0.0
    %v566 = vmax.f32 %v560, 0.0
    %v567 = vadd.f32 %v113, %v561
    %v568 = vadd.f32 %v114, %v562
    %v569 = vadd.f32 %v115, %v563
    %v570 = vadd.f32 %v116, %v564
    %v571 = vadd.f32 %v117, %v565
    %v572 = vadd.f32 %v118, %v566
    %v573 = vadd.f32 %v109, %v395
    %v574 = vadd.f32 %v110, %v396
    %v575 = vadd.f32 %v111, %v397
    %v576 = vadd.f32 %v112, %v398
    %v577 = vadd.f32 %v113, %v567
    %v578 = vadd.f32 %v114, %v568
    %v579 = vadd.f32 %v115, %v569
    %v580 = vadd.f32 %v116, %v570
    %v581 = vadd.f32 %v117, %v571
    %v582 = vadd.f32 %v118, %v572
    %s583 = scalar_lea.vmem [#allocation7], 2
    %v584 = vld [vmem:[%s583] sm:$0x3]
    %s585 = scalar_lea.vmem [#allocation9], 2
    %v586 = vld [vmem:[%s585] sm:$0x3]
    %v587 = vpack.c.bf16 %v569, %v567
    %v588 = vpack.c.bf16 %v570, %v568
    %v589 = vpack.c.bf16 %v571, %v571
    %v590 = vpack.c.bf16 %v572, %v572
    %v592 = vsel %vm134, %v589, 0
    %v595 = vsel %vm134, %v590, 0
    %597 = vmatprep.subr.bf16.mxu0 0
    %598 = vmatpush1.bf16.msra.mxu0 0
    %599 = vmatprep.subr.bf16.mxu0 0
    %600 = vmatpush1.bf16.msra.mxu0 0
    %601 = vmatprep.subr.bf16.mxu0 0
    %602 = vmatpush1.bf16.msra.mxu0 0
    %603 = vmatprep.subr.bf16.mxu0 0
    %604 = vmatpush1.bf16.msra.mxu0 0
    %605 = vmatprep.subr.bf16.mxu0 0
    %606 = vmatpush1.bf16.msra.mxu0 0
    %607 = vmatprep.subr.bf16.mxu0 0
    %608 = vmatpush1.bf16.msra.mxu0 0
    %609 = vmatprep.subr.bf16.mxu0 %v595
    %610 = vmatpush1.bf16.msra.mxu0 %v592
    %611 = vmatprep.subr.bf16.mxu0 %v588
    %612 = vmatpush1.bf16.msra.mxu0 %v587
    %613 = vmatprep.subr.bf16.mxu0 0
    %614 = vmatpush2.bf16.msra.mxu0 0
    %615 = vmatprep.subr.bf16.mxu0 0
    %616 = vmatpush2.bf16.msra.mxu0 0
    %617 = vmatprep.subr.bf16.mxu0 0
    %618 = vmatpush2.bf16.msra.mxu0 0
    %619 = vmatprep.subr.bf16.mxu0 0
    %620 = vmatpush2.bf16.msra.mxu0 0
    %621 = vmatprep.subr.bf16.mxu0 0
    %622 = vmatpush2.bf16.msra.mxu0 0
    %623 = vmatprep.subr.bf16.mxu0 0
    %624 = vmatpush2.bf16.msra.mxu0 0
    %625 = vmatprep.subr.bf16.mxu0 0
    %626 = vmatpush2.bf16.msra.mxu0 0
    %627 = vmatprep.subr.bf16.mxu0 0
    %628 = vmatpush2.bf16.msra.mxu0 0
    %629 = vmatprep.mubr.bf16.mxu0 0
    %630 = vmatmul.mubr.bf16.gmra.mxu0 %v132
    %v631 = vpop.f32.mrf.mxu0
    %v632 = vadd.f32 0.0, %v631
    %v633 = vpop.f32.mrf.mxu0
    %v634 = vadd.f32 0.0, %v633
    %v635 = vpop.f32.mrf.mxu0
    %v636 = vadd.f32 0.0, %v635
    %v637 = vpop.f32.mrf.mxu0
    %v638 = vadd.f32 0.0, %v637
    %639 = vdwg.mxu0
    %v640 = vpack.c.bf16 %v397, %v395
    %v641 = vpack.c.bf16 %v398, %v396
    %642 = vmatprep.subr.bf16.mxu0 0
    %643 = vmatpush1.bf16.msra.mxu0 0
    %644 = vmatprep.subr.bf16.mxu0 0
    %645 = vmatpush1.bf16.msra.mxu0 0
    %646 = vmatprep.subr.bf16.mxu0 0
    %647 = vmatpush1.bf16.msra.mxu0 0
    %648 = vmatprep.subr.bf16.mxu0 0
    %649 = vmatpush1.bf16.msra.mxu0 0
    %650 = vmatprep.subr.bf16.mxu0 0
    %651 = vmatpush1.bf16.msra.mxu0 0
    %652 = vmatprep.subr.bf16.mxu0 0
    %653 = vmatpush1.bf16.msra.mxu0 0
    %654 = vmatprep.subr.bf16.mxu0 0
    %655 = vmatpush1.bf16.msra.mxu0 0
    %656 = vmatprep.subr.bf16.mxu0 %v641
    %657 = vmatpush1.bf16.msra.mxu0 %v640
    %658 = vmatprep.subr.bf16.mxu0 0
    %659 = vmatpush2.bf16.msra.mxu0 0
    %660 = vmatprep.subr.bf16.mxu0 0
    %661 = vmatpush2.bf16.msra.mxu0 0
    %662 = vmatprep.subr.bf16.mxu0 0
    %663 = vmatpush2.bf16.msra.mxu0 0
    %664 = vmatprep.subr.bf16.mxu0 0
    %665 = vmatpush2.bf16.msra.mxu0 0
    %666 = vmatprep.subr.bf16.mxu0 0
    %667 = vmatpush2.bf16.msra.mxu0 0
    %668 = vmatprep.subr.bf16.mxu0 0
    %669 = vmatpush2.bf16.msra.mxu0 0
    %670 = vmatprep.subr.bf16.mxu0 0
    %671 = vmatpush2.bf16.msra.mxu0 0
    %672 = vmatprep.subr.bf16.mxu0 0
    %673 = vmatpush2.bf16.msra.mxu0 0
    %674 = vmatprep.mubr.bf16.mxu0 0
    %675 = vmatmul.mubr.bf16.gmra.mxu0 %v196
    %v676 = vpop.f32.mrf.mxu0
    %v677 = vadd.f32 0.0, %v676
    %v678 = vpop.f32.mrf.mxu0
    %v679 = vadd.f32 0.0, %v678
    %v680 = vpop.f32.mrf.mxu0
    %v681 = vadd.f32 0.0, %v680
    %v682 = vpop.f32.mrf.mxu0
    %v683 = vadd.f32 0.0, %v682
    %684 = vmatprep.mubr.bf16.mxu0 0
    %685 = vmatmul.mubr.bf16.gmra.mxu0 %v199
    %v686 = vpop.f32.mrf.mxu0
    %v687 = vadd.f32 0.0, %v686
    %v688 = vpop.f32.mrf.mxu0
    %v689 = vadd.f32 0.0, %v688
    %v690 = vpop.f32.mrf.mxu0
    %v691 = vpop.f32.mrf.mxu0
    %692 = vdwg.mxu0
    %v693 = vpack.c.bf16 %v636, %v632
    %v694 = vpack.c.bf16 %v638, %v634
    %s695 = scalar_lea.vmem %s4, 32
    %v696 = vld [vmem:[%s695] sm:$0xf]
    %v697 = vld [vmem:[%s695 + $0x4] sm:$0xf]
    %v698 = vld [vmem:[%s695 + $0x8] sm:$0xf]
    %v699 = vld [vmem:[%s695 + $0xc] sm:$0xf]
    %v704 = vunpack.c.l.b16 %v696
    %v705 = vunpack.c.l.b16 %v697
    %v706 = vunpack.c.l.b16 %v698
    %v707 = vunpack.c.l.b16 %v699
    %v708 = vpack.c.b16 %v705, %v704
    %v709 = vpack.c.b16 %v707, %v706
    %v713 = vsel %vm270, %v693, 0
    %715 = vmatprep.subr.bf16.mxu0 0
    %716 = vmatpush1.bf16.msra.mxu0 0
    %717 = vmatprep.subr.bf16.mxu0 0
    %718 = vmatpush1.bf16.msra.mxu0 0
    %719 = vmatprep.subr.bf16.mxu0 0
    %720 = vmatpush1.bf16.msra.mxu0 0
    %721 = vmatprep.subr.bf16.mxu0 0
    %722 = vmatpush1.bf16.msra.mxu0 0
    %723 = vmatprep.subr.bf16.mxu0 0
    %724 = vmatpush1.bf16.msra.mxu0 0
    %725 = vmatprep.subr.bf16.mxu0 0
    %726 = vmatpush1.bf16.msra.mxu0 0
    %727 = vmatprep.subr.bf16.mxu0 0
    %728 = vmatpush1.bf16.msra.mxu0 %v709
    %729 = vmatprep.subr.bf16.mxu0 0
    %730 = vmatpush1.bf16.msra.mxu0 %v708
    %731 = vmatprep.subr.bf16.mxu0 0
    %732 = vmatpush2.bf16.msra.mxu0 0
    %733 = vmatprep.subr.bf16.mxu0 0
    %734 = vmatpush2.bf16.msra.mxu0 0
    %735 = vmatprep.subr.bf16.mxu0 0
    %736 = vmatpush2.bf16.msra.mxu0 0
    %737 = vmatprep.subr.bf16.mxu0 0
    %738 = vmatpush2.bf16.msra.mxu0 0
    %739 = vmatprep.subr.bf16.mxu0 0
    %740 = vmatpush2.bf16.msra.mxu0 0
    %741 = vmatprep.subr.bf16.mxu0 0
    %742 = vmatpush2.bf16.msra.mxu0 0
    %743 = vmatprep.subr.bf16.mxu0 0
    %744 = vmatpush2.bf16.msra.mxu0 0
    %745 = vmatprep.subr.bf16.mxu0 0
    %746 = vmatpush2.bf16.msra.mxu0 0
    %747 = vmatprep.mubr.bf16.mxu0 0
    %748 = vmatmul.mubr.bf16.gmra.mxu0 %v713
    %v749 = vpop.f32.mrf.mxu0
    %v750 = vadd.f32 0.0, %v749
    %v751 = vpop.f32.mrf.mxu0
    %v752 = vpop.f32.mrf.mxu0
    %v753 = vadd.f32 0.0, %v752
    %v754 = vpop.f32.mrf.mxu0
    %755 = vdwg.mxu0
    %s756 = scalar_lea.vmem %s4, 48
    %v757 = vld [vmem:[%s756] sm:$0xf]
    %v758 = vld [vmem:[%s756 + $0x4] sm:$0xf]
    %v759 = vld [vmem:[%s756 + $0x8] sm:$0xf]
    %v760 = vld [vmem:[%s756 + $0xc] sm:$0xf]
    %v765 = vunpack.c.l.b16 %v757
    %v766 = vunpack.c.l.b16 %v758
    %v767 = vunpack.c.l.b16 %v759
    %v768 = vunpack.c.l.b16 %v760
    %v769 = vpack.c.b16 %v766, %v765
    %v770 = vpack.c.b16 %v768, %v767
    %v774 = vsel %vm270, %v694, 0
    %776 = vmatprep.subr.bf16.mxu0 0
    %777 = vmatpush1.bf16.msra.mxu0 0
    %778 = vmatprep.subr.bf16.mxu0 0
    %779 = vmatpush1.bf16.msra.mxu0 0
    %780 = vmatprep.subr.bf16.mxu0 0
    %781 = vmatpush1.bf16.msra.mxu0 0
    %782 = vmatprep.subr.bf16.mxu0 0
    %783 = vmatpush1.bf16.msra.mxu0 0
    %784 = vmatprep.subr.bf16.mxu0 0
    %785 = vmatpush1.bf16.msra.mxu0 0
    %786 = vmatprep.subr.bf16.mxu0 0
    %787 = vmatpush1.bf16.msra.mxu0 0
    %788 = vmatprep.subr.bf16.mxu0 0
    %789 = vmatpush1.bf16.msra.mxu0 %v770
    %790 = vmatprep.subr.bf16.mxu0 0
    %791 = vmatpush1.bf16.msra.mxu0 %v769
    %792 = vmatprep.subr.bf16.mxu0 0
    %793 = vmatpush2.bf16.msra.mxu0 0
    %794 = vmatprep.subr.bf16.mxu0 0
    %795 = vmatpush2.bf16.msra.mxu0 0
    %796 = vmatprep.subr.bf16.mxu0 0
    %797 = vmatpush2.bf16.msra.mxu0 0
    %798 = vmatprep.subr.bf16.mxu0 0
    %799 = vmatpush2.bf16.msra.mxu0 0
    %800 = vmatprep.subr.bf16.mxu0 0
    %801 = vmatpush2.bf16.msra.mxu0 0
    %802 = vmatprep.subr.bf16.mxu0 0
    %803 = vmatpush2.bf16.msra.mxu0 0
    %804 = vmatprep.subr.bf16.mxu0 0
    %805 = vmatpush2.bf16.msra.mxu0 0
    %806 = vmatprep.subr.bf16.mxu0 0
    %807 = vmatpush2.bf16.msra.mxu0 0
    %808 = vmatprep.mubr.bf16.mxu0 0
    %809 = vmatmul.mubr.bf16.gmra.mxu0 %v774
    %v810 = vpop.f32.mrf.mxu0
    %v811 = vadd.f32 0.0, %v810
    %v812 = vpop.f32.mrf.mxu0
    %v813 = vpop.f32.mrf.mxu0
    %v814 = vadd.f32 0.0, %v813
    %v815 = vpop.f32.mrf.mxu0
    %816 = vdwg.mxu0
    %v818 = vlaneseq
    %v819 = vshrl.u32 %v818, 7
    %v820 = vsub.s32 0, %v819
    %v821 = vrot.slane %v584, %v820
    %v822 = vlaneseq
    %v823 = vshrl.u32 %v822, 7
    %v824 = vsub.s32 1, %v823
    %v825 = vrot.slane %v584, %v824
    %v828 = vadd.f32 %v750, %v821
    %v829 = vadd.f32 %v811, %v825
    %v830 = vadd.f32 %v753, %v821
    %v831 = vadd.f32 %v814, %v825
    %v832 = vmax.f32 %v828, 0.0
    %v833 = vmax.f32 %v829, 0.0
    %v834 = vmax.f32 %v830, 0.0
    %v835 = vmax.f32 %v831, 0.0
    %v836 = vadd.f32 %v395, %v832
    %v837 = vadd.f32 %v396, %v833
    %v838 = vadd.f32 %v397, %v834
    %v839 = vadd.f32 %v398, %v835
    %v840 = vpack.c.bf16 %v681, %v677
    %v841 = vpack.c.bf16 %v687, %v687
    %v842 = vpack.c.bf16 %v683, %v679
    %v843 = vpack.c.bf16 %v689, %v689
    %s844 = scalar_lea.vmem [#allocation6], 32
    %v845 = vld [vmem:[%s844] sm:$0xf]
    %v846 = vld [vmem:[%s844 + $0x4] sm:$0xf]
    %v847 = vld [vmem:[%s844 + $0x8] sm:$0xf]
    %v848 = vld [vmem:[%s844 + $0xc] sm:$0xf]
    %v853 = vunpack.c.l.b16 %v845
    %v854 = vunpack.c.l.b16 %v846
    %v855 = vunpack.c.l.b16 %v847
    %v856 = vunpack.c.l.b16 %v848
    %v857 = vpack.c.b16 %v854, %v853
    %v858 = vpack.c.b16 %v856, %v855
    %v862 = vsel %vm270, %v840, 0
    %v865 = vsel %vm270, %v841, 0
    %867 = vmatprep.subr.bf16.mxu0 0
    %868 = vmatpush1.bf16.msra.mxu0 0
    %869 = vmatprep.subr.bf16.mxu0 0
    %870 = vmatpush1.bf16.msra.mxu0 0
    %871 = vmatprep.subr.bf16.mxu0 0
    %872 = vmatpush1.bf16.msra.mxu0 0
    %873 = vmatprep.subr.bf16.mxu0 0
    %874 = vmatpush1.bf16.msra.mxu0 0
    %875 = vmatprep.subr.bf16.mxu0 0
    %876 = vmatpush1.bf16.msra.mxu0 0
    %877 = vmatprep.subr.bf16.mxu0 0
    %878 = vmatpush1.bf16.msra.mxu0 0
    %879 = vmatprep.subr.bf16.mxu0 0
    %880 = vmatpush1.bf16.msra.mxu0 %v858
    %881 = vmatprep.subr.bf16.mxu0 0
    %882 = vmatpush1.bf16.msra.mxu0 %v857
    %883 = vmatprep.subr.bf16.mxu0 0
    %884 = vmatpush2.bf16.msra.mxu0 0
    %885 = vmatprep.subr.bf16.mxu0 0
    %886 = vmatpush2.bf16.msra.mxu0 0
    %887 = vmatprep.subr.bf16.mxu0 0
    %888 = vmatpush2.bf16.msra.mxu0 0
    %889 = vmatprep.subr.bf16.mxu0 0
    %890 = vmatpush2.bf16.msra.mxu0 0
    %891 = vmatprep.subr.bf16.mxu0 0
    %892 = vmatpush2.bf16.msra.mxu0 0
    %893 = vmatprep.subr.bf16.mxu0 0
    %894 = vmatpush2.bf16.msra.mxu0 0
    %895 = vmatprep.subr.bf16.mxu0 0
    %896 = vmatpush2.bf16.msra.mxu0 0
    %897 = vmatprep.subr.bf16.mxu0 0
    %898 = vmatpush2.bf16.msra.mxu0 0
    %899 = vmatprep.mubr.bf16.mxu0 0
    %900 = vmatmul.mubr.bf16.gmra.mxu0 %v862
    %v901 = vpop.f32.mrf.mxu0
    %v902 = vadd.f32 0.0, %v901
    %v903 = vpop.f32.mrf.mxu0
    %v904 = vpop.f32.mrf.mxu0
    %v905 = vadd.f32 0.0, %v904
    %v906 = vpop.f32.mrf.mxu0
    %907 = vmatprep.mubr.bf16.mxu0 0
    %908 = vmatmul.mubr.bf16.gmra.mxu0 %v865
    %v909 = vpop.f32.mrf.mxu0
    %v910 = vadd.f32 0.0, %v909
    %v911 = vpop.f32.mrf.mxu0
    %v912 = vpop.f32.mrf.mxu0
    %v913 = vpop.f32.mrf.mxu0
    %914 = vdwg.mxu0
    %s915 = scalar_lea.vmem [#allocation6], 48
    %v916 = vld [vmem:[%s915] sm:$0xf]
    %v917 = vld [vmem:[%s915 + $0x4] sm:$0xf]
    %v918 = vld [vmem:[%s915 + $0x8] sm:$0xf]
    %v919 = vld [vmem:[%s915 + $0xc] sm:$0xf]
    %v924 = vunpack.c.l.b16 %v916
    %v925 = vunpack.c.l.b16 %v917
    %v926 = vunpack.c.l.b16 %v918
    %v927 = vunpack.c.l.b16 %v919
    %v928 = vpack.c.b16 %v925, %v924
    %v929 = vpack.c.b16 %v927, %v926
    %v933 = vsel %vm270, %v842, 0
    %v936 = vsel %vm270, %v843, 0
    %938 = vmatprep.subr.bf16.mxu0 0
    %939 = vmatpush1.bf16.msra.mxu0 0
    %940 = vmatprep.subr.bf16.mxu0 0
    %941 = vmatpush1.bf16.msra.mxu0 0
    %942 = vmatprep.subr.bf16.mxu0 0
    %943 = vmatpush1.bf16.msra.mxu0 0
    %944 = vmatprep.subr.bf16.mxu0 0
    %945 = vmatpush1.bf16.msra.mxu0 0
    %946 = vmatprep.subr.bf16.mxu0 0
    %947 = vmatpush1.bf16.msra.mxu0 0
    %948 = vmatprep.subr.bf16.mxu0 0
    %949 = vmatpush1.bf16.msra.mxu0 0
    %950 = vmatprep.subr.bf16.mxu0 0
    %951 = vmatpush1.bf16.msra.mxu0 %v929
    %952 = vmatprep.subr.bf16.mxu0 0
    %953 = vmatpush1.bf16.msra.mxu0 %v928
    %954 = vmatprep.subr.bf16.mxu0 0
    %955 = vmatpush2.bf16.msra.mxu0 0
    %956 = vmatprep.subr.bf16.mxu0 0
    %957 = vmatpush2.bf16.msra.mxu0 0
    %958 = vmatprep.subr.bf16.mxu0 0
    %959 = vmatpush2.bf16.msra.mxu0 0
    %960 = vmatprep.subr.bf16.mxu0 0
    %961 = vmatpush2.bf16.msra.mxu0 0
    %962 = vmatprep.subr.bf16.mxu0 0
    %963 = vmatpush2.bf16.msra.mxu0 0
    %964 = vmatprep.subr.bf16.mxu0 0
    %965 = vmatpush2.bf16.msra.mxu0 0
    %966 = vmatprep.subr.bf16.mxu0 0
    %967 = vmatpush2.bf16.msra.mxu0 0
    %968 = vmatprep.subr.bf16.mxu0 0
    %969 = vmatpush2.bf16.msra.mxu0 0
    %970 = vmatprep.mubr.bf16.mxu0 0
    %971 = vmatmul.mubr.bf16.gmra.mxu0 %v933
    %v972 = vpop.f32.mrf.mxu0
    %v973 = vadd.f32 0.0, %v972
    %v974 = vpop.f32.mrf.mxu0
    %v975 = vpop.f32.mrf.mxu0
    %v976 = vadd.f32 0.0, %v975
    %v977 = vpop.f32.mrf.mxu0
    %978 = vmatprep.mubr.bf16.mxu0 0
    %979 = vmatmul.mubr.bf16.gmra.mxu0 %v936
    %v980 = vpop.f32.mrf.mxu0
    %v981 = vadd.f32 0.0, %v980
    %v982 = vpop.f32.mrf.mxu0
    %v983 = vpop.f32.mrf.mxu0
    %v984 = vpop.f32.mrf.mxu0
    %985 = vdwg.mxu0
    %v987 = vlaneseq
    %v988 = vshrl.u32 %v987, 7
    %v989 = vsub.s32 0, %v988
    %v990 = vrot.slane %v586, %v989
    %v991 = vlaneseq
    %v992 = vshrl.u32 %v991, 7
    %v993 = vsub.s32 1, %v992
    %v994 = vrot.slane %v586, %v993
    %v997 = vadd.f32 %v902, %v990
    %v998 = vadd.f32 %v973, %v994
    %v999 = vadd.f32 %v905, %v990
    %v1000 = vadd.f32 %v976, %v994
    %v1001 = vadd.f32 %v910, %v990
    %v1002 = vadd.f32 %v981, %v994
    %v1003 = vmax.f32 %v997, 0.0
    %v1004 = vmax.f32 %v998, 0.0
    %v1005 = vmax.f32 %v999, 0.0
    %v1006 = vmax.f32 %v1000, 0.0
    %v1007 = vmax.f32 %v1001, 0.0
    %v1008 = vmax.f32 %v1002, 0.0
    %v1009 = vadd.f32 %v567, %v1003
    %v1010 = vadd.f32 %v568, %v1004
    %v1011 = vadd.f32 %v569, %v1005
    %v1012 = vadd.f32 %v570, %v1006
    %v1013 = vadd.f32 %v571, %v1007
    %v1014 = vadd.f32 %v572, %v1008
    %v1015 = vadd.f32 %v573, %v836
    %v1016 = vadd.f32 %v574, %v837
    %v1017 = vadd.f32 %v575, %v838
    %v1018 = vadd.f32 %v576, %v839
    %v1019 = vadd.f32 %v577, %v1009
    %v1020 = vadd.f32 %v578, %v1010
    %v1021 = vadd.f32 %v579, %v1011
    %v1022 = vadd.f32 %v580, %v1012
    %v1023 = vadd.f32 %v581, %v1013
    %v1024 = vadd.f32 %v582, %v1014
    %v1025 = vmul.f32 %v1015, 0.33333334
    %v1026 = vmul.f32 %v1016, 0.33333334
    %v1027 = vmul.f32 %v1017, 0.33333334
    %v1028 = vmul.f32 %v1018, 0.33333334
    %v1029 = vmul.f32 %v1019, 0.33333334
    %v1030 = vmul.f32 %v1020, 0.33333334
    %v1031 = vmul.f32 %v1021, 0.33333334
    %v1032 = vmul.f32 %v1022, 0.33333334
    %v1033 = vmul.f32 %v1023, 0.33333334
    %v1034 = vmul.f32 %v1024, 0.33333334
    %v1035 = vmul.f32 %v1025, %v1025
    %v1036 = vmul.f32 %v1027, %v1027
    %1037 = vadd.xlane.f32.xlu0 %v1035
    %v1038 = vpop.xlane.xlu0 %1037
    %1039 = vadd.xlane.f32.xlu0 %v1036
    %v1040 = vpop.xlane.xlu0 %1039
    %v1041 = vadd.f32 %v1038, 1e-24
    %v1042 = vadd.f32 %v1040, 1e-24
    %v1043 = vrsqrt.pop %v1041
    %v1044 = vrsqrt.pop %v1042
    %v1045 = vmul.f32 %v1026, %v1026
    %v1046 = vmul.f32 %v1028, %v1028
    %1047 = vadd.xlane.f32.xlu0 %v1045
    %v1048 = vpop.xlane.xlu0 %1047
    %1049 = vadd.xlane.f32.xlu0 %v1046
    %v1050 = vpop.xlane.xlu0 %1049
    %v1051 = vadd.f32 %v1048, 1e-24
    %v1052 = vadd.f32 %v1050, 1e-24
    %v1053 = vrsqrt.pop %v1051
    %v1054 = vrsqrt.pop %v1052
    %v1055 = vlaneseq
    %v1056 = vand.u32 %v1055, 127
    %v1057 = vadd.s32 %v1056, 128
    %vm1058 = vcmp.lt.s32.totalorder %v1056, 128
    %vm1059 = vcmp.lt.s32.totalorder %v1057, 128
    %v1060 = vsel %vm1058, %v1043, %v1053
    %v1061 = vsel %vm1059, %v1043, %v1053
    %v1062 = vsel %vm1058, %v1044, %v1054
    %v1063 = vsel %vm1059, %v1044, %v1054
    %v1064 = vmul.f32 %v1025, %v1060
    %v1065 = vmul.f32 %v1026, %v1061
    %v1066 = vmul.f32 %v1027, %v1062
    %v1067 = vmul.f32 %v1028, %v1063
    %v1068 = vmul.f32 %v1029, %v1029
    %v1069 = vmul.f32 %v1031, %v1031
    %v1070 = vmul.f32 %v1033, %v1033
    %1071 = vadd.xlane.f32.xlu0 %v1068
    %v1072 = vpop.xlane.xlu0 %1071
    %1073 = vadd.xlane.f32.xlu0 %v1069
    %v1074 = vpop.xlane.xlu0 %1073
    %1075 = vadd.xlane.f32.xlu0 %v1070
    %v1076 = vpop.xlane.xlu0 %1075
    %v1077 = vadd.f32 %v1072, 1e-24
    %v1078 = vadd.f32 %v1074, 1e-24
    %v1079 = vadd.f32 %v1076, 1e-24
    %v1080 = vrsqrt.pop %v1077
    %v1081 = vrsqrt.pop %v1078
    %v1082 = vrsqrt.pop %v1079
    %v1083 = vmul.f32 %v1030, %v1030
    %v1084 = vmul.f32 %v1032, %v1032
    %v1085 = vmul.f32 %v1034, %v1034
    %1086 = vadd.xlane.f32.xlu0 %v1083
    %v1087 = vpop.xlane.xlu0 %1086
    %1088 = vadd.xlane.f32.xlu0 %v1084
    %v1089 = vpop.xlane.xlu0 %1088
    %1090 = vadd.xlane.f32.xlu0 %v1085
    %v1091 = vpop.xlane.xlu0 %1090
    %v1092 = vadd.f32 %v1087, 1e-24
    %v1093 = vadd.f32 %v1089, 1e-24
    %v1094 = vadd.f32 %v1091, 1e-24
    %v1095 = vrsqrt.pop %v1092
    %v1096 = vrsqrt.pop %v1093
    %v1097 = vrsqrt.pop %v1094
    %v1098 = vsel %vm1058, %v1080, %v1095
    %v1099 = vsel %vm1059, %v1080, %v1095
    %v1100 = vsel %vm1058, %v1081, %v1096
    %v1101 = vsel %vm1059, %v1081, %v1096
    %v1102 = vsel %vm1058, %v1082, %v1097
    %v1103 = vsel %vm1059, %v1082, %v1097
    %v1104 = vmul.f32 %v1029, %v1098
    %v1105 = vmul.f32 %v1030, %v1099
    %v1106 = vmul.f32 %v1031, %v1100
    %v1107 = vmul.f32 %v1032, %v1101
    %v1108 = vmul.f32 %v1033, %v1102
    %v1109 = vmul.f32 %v1034, %v1103
    %v1110 = vld [vmem:[%s8] sm:$0xff]
    %v1112 = vsel %vm194, %v1110, 0
    %1114 = vmatprep.subr.mxu0 0.0
    %1115 = vmatpush1.msra.mxu0 0.0
    %1116 = vmatprep.subr.mxu0 0.0
    %1117 = vmatpush1.msra.mxu0 0.0
    %1118 = vmatprep.subr.mxu0 0.0
    %1119 = vmatpush1.msra.mxu0 0.0
    %1120 = vmatprep.subr.mxu0 0.0
    %1121 = vmatpush1.msra.mxu0 0.0
    %1122 = vmatprep.subr.mxu0 0.0
    %1123 = vmatpush1.msra.mxu0 0.0
    %1124 = vmatprep.subr.mxu0 0.0
    %1125 = vmatpush1.msra.mxu0 0.0
    %1126 = vmatprep.subr.mxu0 0.0
    %1127 = vmatpush1.msra.mxu0 0.0
    %1128 = vmatprep.subr.mxu0 0.0
    %1129 = vmatpush1.msra.mxu0 0.0
    %1130 = vmatprep.subr.mxu0 0.0
    %1131 = vmatpush1.msra.mxu0 0.0
    %1132 = vmatprep.subr.mxu0 0.0
    %1133 = vmatpush1.msra.mxu0 0.0
    %1134 = vmatprep.subr.mxu0 0.0
    %1135 = vmatpush1.msra.mxu0 0.0
    %1136 = vmatprep.subr.mxu0 0.0
    %1137 = vmatpush1.msra.mxu0 0.0
    %1138 = vmatprep.subr.mxu0 0.0
    %1139 = vmatpush1.msra.mxu0 0.0
    %1140 = vmatprep.subr.mxu0 0.0
    %1141 = vmatpush1.msra.mxu0 0.0
    %1142 = vmatprep.subr.mxu0 %v1067
    %1143 = vmatpush1.msra.mxu0 %v1066
    %1144 = vmatprep.subr.mxu0 %v1065
    %1145 = vmatpush1.msra.mxu0 %v1064
    %1146 = vmatprep.subr.mxu0 0.0
    %1147 = vmatpush2.msra.mxu0 0.0
    %1148 = vmatprep.subr.mxu0 0.0
    %1149 = vmatpush2.msra.mxu0 0.0
    %1150 = vmatprep.subr.mxu0 0.0
    %1151 = vmatpush2.msra.mxu0 0.0
    %1152 = vmatprep.subr.mxu0 0.0
    %1153 = vmatpush2.msra.mxu0 0.0
    %1154 = vmatprep.subr.mxu0 0.0
    %1155 = vmatpush2.msra.mxu0 0.0
    %1156 = vmatprep.subr.mxu0 0.0
    %1157 = vmatpush2.msra.mxu0 0.0
    %1158 = vmatprep.subr.mxu0 0.0
    %1159 = vmatpush2.msra.mxu0 0.0
    %1160 = vmatprep.subr.mxu0 0.0
    %1161 = vmatpush2.msra.mxu0 0.0
    %1162 = vmatprep.subr.mxu0 0.0
    %1163 = vmatpush2.msra.mxu0 0.0
    %1164 = vmatprep.subr.mxu0 0.0
    %1165 = vmatpush2.msra.mxu0 0.0
    %1166 = vmatprep.subr.mxu0 0.0
    %1167 = vmatpush2.msra.mxu0 0.0
    %1168 = vmatprep.subr.mxu0 0.0
    %1169 = vmatpush2.msra.mxu0 0.0
    %1170 = vmatprep.subr.mxu0 0.0
    %1171 = vmatpush2.msra.mxu0 0.0
    %1172 = vmatprep.subr.mxu0 0.0
    %1173 = vmatpush2.msra.mxu0 0.0
    %1174 = vmatprep.subr.mxu0 0.0
    %1175 = vmatpush2.msra.mxu0 0.0
    %1176 = vmatprep.subr.mxu0 0.0
    %1177 = vmatpush2.msra.mxu0 0.0
    %1178 = vmatprep.mubr.f32.mxu0 0.0
    %1179 = vmatmul.mubr.f32.gmra.mxu0 %v1112
    %v1180 = vpop.f32.mrf.mxu0
    %v1181 = vadd.f32 0.0, %v1180
    %v1182 = vpop.f32.mrf.mxu0
    %v1183 = vadd.f32 0.0, %v1182
    %1184 = vdwg.mxu0
    %v1185 = vld [vmem:[%s9] sm:$0xff]
    %v1186 = vld [vmem:[%s9 + $0x8] sm:$0xff]
    %v1187 = vld [vmem:[%s9 + $0x10] sm:$0xff]
    %v1188 = vld [vmem:[%s9 + $0x18] sm:$0xff]
    %v1189 = vld [vmem:[%s9 + $0x20] sm:$0xff]
    %v1191 = vsel %vm130, %v1185, 0
    %v1194 = vsel %vm130, %v1186, 0
    %v1197 = vsel %vm130, %v1187, 0
    %v1200 = vsel %vm130, %v1188, 0
    %v1203 = vsel %vm130, %v1189, 0
    %1205 = vmatprep.subr.mxu0 0.0
    %1206 = vmatpush1.msra.mxu0 0.0
    %1207 = vmatprep.subr.mxu0 0.0
    %1208 = vmatpush1.msra.mxu0 0.0
    %1209 = vmatprep.subr.mxu0 0.0
    %1210 = vmatpush1.msra.mxu0 0.0
    %1211 = vmatprep.subr.mxu0 0.0
    %1212 = vmatpush1.msra.mxu0 0.0
    %1213 = vmatprep.subr.mxu0 0.0
    %1214 = vmatpush1.msra.mxu0 0.0
    %1215 = vmatprep.subr.mxu0 0.0
    %1216 = vmatpush1.msra.mxu0 0.0
    %1217 = vmatprep.subr.mxu0 0.0
    %1218 = vmatpush1.msra.mxu0 0.0
    %1219 = vmatprep.subr.mxu0 0.0
    %1220 = vmatpush1.msra.mxu0 0.0
    %1221 = vmatprep.subr.mxu0 0.0
    %1222 = vmatpush1.msra.mxu0 0.0
    %1223 = vmatprep.subr.mxu0 0.0
    %1224 = vmatpush1.msra.mxu0 0.0
    %1225 = vmatprep.subr.mxu0 0.0
    %1226 = vmatpush1.msra.mxu0 0.0
    %1227 = vmatprep.subr.mxu0 0.0
    %1228 = vmatpush1.msra.mxu0 0.0
    %1229 = vmatprep.subr.mxu0 0.0
    %1230 = vmatpush1.msra.mxu0 0.0
    %1231 = vmatprep.subr.mxu0 %v1109
    %1232 = vmatpush1.msra.mxu0 %v1108
    %1233 = vmatprep.subr.mxu0 %v1107
    %1234 = vmatpush1.msra.mxu0 %v1106
    %1235 = vmatprep.subr.mxu0 %v1105
    %1236 = vmatpush1.msra.mxu0 %v1104
    %1237 = vmatprep.subr.mxu0 0.0
    %1238 = vmatpush2.msra.mxu0 0.0
    %1239 = vmatprep.subr.mxu0 0.0
    %1240 = vmatpush2.msra.mxu0 0.0
    %1241 = vmatprep.subr.mxu0 0.0
    %1242 = vmatpush2.msra.mxu0 0.0
    %1243 = vmatprep.subr.mxu0 0.0
    %1244 = vmatpush2.msra.mxu0 0.0
    %1245 = vmatprep.subr.mxu0 0.0
    %1246 = vmatpush2.msra.mxu0 0.0
    %1247 = vmatprep.subr.mxu0 0.0
    %1248 = vmatpush2.msra.mxu0 0.0
    %1249 = vmatprep.subr.mxu0 0.0
    %1250 = vmatpush2.msra.mxu0 0.0
    %1251 = vmatprep.subr.mxu0 0.0
    %1252 = vmatpush2.msra.mxu0 0.0
    %1253 = vmatprep.subr.mxu0 0.0
    %1254 = vmatpush2.msra.mxu0 0.0
    %1255 = vmatprep.subr.mxu0 0.0
    %1256 = vmatpush2.msra.mxu0 0.0
    %1257 = vmatprep.subr.mxu0 0.0
    %1258 = vmatpush2.msra.mxu0 0.0
    %1259 = vmatprep.subr.mxu0 0.0
    %1260 = vmatpush2.msra.mxu0 0.0
    %1261 = vmatprep.subr.mxu0 0.0
    %1262 = vmatpush2.msra.mxu0 0.0
    %1263 = vmatprep.subr.mxu0 0.0
    %1264 = vmatpush2.msra.mxu0 0.0
    %1265 = vmatprep.subr.mxu0 0.0
    %1266 = vmatpush2.msra.mxu0 0.0
    %1267 = vmatprep.subr.mxu0 0.0
    %1268 = vmatpush2.msra.mxu0 0.0
    %1269 = vmatprep.mubr.f32.mxu0 0.0
    %1270 = vmatmul.mubr.f32.gmra.mxu0 %v1191
    %v1271 = vpop.f32.mrf.mxu0
    %v1272 = vadd.f32 0.0, %v1271
    %v1273 = vpop.f32.mrf.mxu0
    %v1274 = vadd.f32 0.0, %v1273
    %1275 = vmatprep.mubr.f32.mxu0 0.0
    %1276 = vmatmul.mubr.f32.gmra.mxu0 %v1194
    %v1277 = vpop.f32.mrf.mxu0
    %v1278 = vadd.f32 0.0, %v1277
    %v1279 = vpop.f32.mrf.mxu0
    %1280 = vmatprep.mubr.f32.mxu0 0.0
    %1281 = vmatmul.mubr.f32.gmra.mxu0 %v1197
    %v1282 = vpop.f32.mrf.mxu0
    %v1283 = vadd.f32 0.0, %v1282
    %v1284 = vpop.f32.mrf.mxu0
    %1285 = vmatprep.mubr.f32.mxu0 0.0
    %1286 = vmatmul.mubr.f32.gmra.mxu0 %v1200
    %v1287 = vpop.f32.mrf.mxu0
    %v1288 = vadd.f32 0.0, %v1287
    %v1289 = vpop.f32.mrf.mxu0
    %1290 = vmatprep.mubr.f32.mxu0 0.0
    %1291 = vmatmul.mubr.f32.gmra.mxu0 %v1203
    %v1292 = vpop.f32.mrf.mxu0
    %v1293 = vadd.f32 0.0, %v1292
    %v1294 = vpop.f32.mrf.mxu0
    %1295 = vdwg.mxu0
    %1296 = vmatprep.subr.mxu0 0.0
    %1297 = vmatpush1.xpose.msra.mxu0 0.0
    %1298 = vmatprep.subr.mxu0 0.0
    %1299 = vmatpush1.xpose.msra.mxu0 0.0
    %1300 = vmatprep.subr.mxu0 0.0
    %1301 = vmatpush1.xpose.msra.mxu0 0.0
    %1302 = vmatprep.subr.mxu0 0.0
    %1303 = vmatpush1.xpose.msra.mxu0 0.0
    %1304 = vmatprep.subr.mxu0 0.0
    %1305 = vmatpush1.xpose.msra.mxu0 0.0
    %1306 = vmatprep.subr.mxu0 0.0
    %1307 = vmatpush1.xpose.msra.mxu0 0.0
    %1308 = vmatprep.subr.mxu0 0.0
    %1309 = vmatpush1.xpose.msra.mxu0 0.0
    %1310 = vmatprep.subr.mxu0 0.0
    %1311 = vmatpush1.xpose.msra.mxu0 0.0
    %1312 = vmatprep.subr.mxu0 0.0
    %1313 = vmatpush1.xpose.msra.mxu0 0.0
    %1314 = vmatprep.subr.mxu0 0.0
    %1315 = vmatpush1.xpose.msra.mxu0 0.0
    %1316 = vmatprep.subr.mxu0 0.0
    %1317 = vmatpush1.xpose.msra.mxu0 0.0
    %1318 = vmatprep.subr.mxu0 0.0
    %1319 = vmatpush1.xpose.msra.mxu0 0.0
    %1320 = vmatprep.subr.mxu0 0.0
    %1321 = vmatpush1.xpose.msra.mxu0 0.0
    %1322 = vmatprep.subr.mxu0 0.0
    %1323 = vmatpush1.xpose.msra.mxu0 0.0
    %1324 = vmatprep.subr.mxu0 0.0
    %1325 = vmatpush1.xpose.msra.mxu0 0.0
    %1326 = vmatprep.subr.mxu0 0.0
    %1327 = vmatpush1.xpose.msra.mxu0 %v1181
    %1328 = vmatprep.subr.mxu0 0.0
    %1329 = vmatpush2.xpose.msra.mxu0 0.0
    %1330 = vmatprep.subr.mxu0 0.0
    %1331 = vmatpush2.xpose.msra.mxu0 0.0
    %1332 = vmatprep.subr.mxu0 0.0
    %1333 = vmatpush2.xpose.msra.mxu0 0.0
    %1334 = vmatprep.subr.mxu0 0.0
    %1335 = vmatpush2.xpose.msra.mxu0 0.0
    %1336 = vmatprep.subr.mxu0 0.0
    %1337 = vmatpush2.xpose.msra.mxu0 0.0
    %1338 = vmatprep.subr.mxu0 0.0
    %1339 = vmatpush2.xpose.msra.mxu0 0.0
    %1340 = vmatprep.subr.mxu0 0.0
    %1341 = vmatpush2.xpose.msra.mxu0 0.0
    %1342 = vmatprep.subr.mxu0 0.0
    %1343 = vmatpush2.xpose.msra.mxu0 0.0
    %1344 = vmatprep.subr.mxu0 0.0
    %1345 = vmatpush2.xpose.msra.mxu0 0.0
    %1346 = vmatprep.subr.mxu0 0.0
    %1347 = vmatpush2.xpose.msra.mxu0 0.0
    %1348 = vmatprep.subr.mxu0 0.0
    %1349 = vmatpush2.xpose.msra.mxu0 0.0
    %1350 = vmatprep.subr.mxu0 0.0
    %1351 = vmatpush2.xpose.msra.mxu0 0.0
    %1352 = vmatprep.subr.mxu0 0.0
    %1353 = vmatpush2.xpose.msra.mxu0 0.0
    %1354 = vmatprep.subr.mxu0 0.0
    %1355 = vmatpush2.xpose.msra.mxu0 0.0
    %1356 = vmatprep.subr.mxu0 0.0
    %1357 = vmatpush2.xpose.msra.mxu0 0.0
    %1358 = vmatprep.subr.mxu0 0.0
    %1359 = vmatpush2.xpose.msra.mxu0 0.0
    %1360 = vmatprep.mubr.f32.mxu0 0.0
    %1361 = vmatmul.mubr.f32.gmra.mxu0 %v1183
    %v1362 = vpop.f32.mrf.mxu0
    %v1363 = vadd.f32 0.0, %v1362
    %v1364 = vpop.f32.mrf.mxu0
    %1365 = vdwg.mxu0
    %v1366 = vmul.f32 %v1363, 5.0
    %1367 = vmatprep.subr.mxu0 0.0
    %1368 = vmatpush1.xpose.msra.mxu0 0.0
    %1369 = vmatprep.subr.mxu0 0.0
    %1370 = vmatpush1.xpose.msra.mxu0 0.0
    %1371 = vmatprep.subr.mxu0 0.0
    %1372 = vmatpush1.xpose.msra.mxu0 0.0
    %1373 = vmatprep.subr.mxu0 0.0
    %1374 = vmatpush1.xpose.msra.mxu0 0.0
    %1375 = vmatprep.subr.mxu0 0.0
    %1376 = vmatpush1.xpose.msra.mxu0 0.0
    %1377 = vmatprep.subr.mxu0 0.0
    %1378 = vmatpush1.xpose.msra.mxu0 0.0
    %1379 = vmatprep.subr.mxu0 0.0
    %1380 = vmatpush1.xpose.msra.mxu0 0.0
    %1381 = vmatprep.subr.mxu0 0.0
    %1382 = vmatpush1.xpose.msra.mxu0 0.0
    %1383 = vmatprep.subr.mxu0 0.0
    %1384 = vmatpush1.xpose.msra.mxu0 0.0
    %1385 = vmatprep.subr.mxu0 0.0
    %1386 = vmatpush1.xpose.msra.mxu0 0.0
    %1387 = vmatprep.subr.mxu0 0.0
    %1388 = vmatpush1.xpose.msra.mxu0 0.0
    %1389 = vmatprep.subr.mxu0 0.0
    %1390 = vmatpush1.xpose.msra.mxu0 0.0
    %1391 = vmatprep.subr.mxu0 0.0
    %1392 = vmatpush1.xpose.msra.mxu0 0.0
    %1393 = vmatprep.subr.mxu0 0.0
    %1394 = vmatpush1.xpose.msra.mxu0 0.0
    %1395 = vmatprep.subr.mxu0 0.0
    %1396 = vmatpush1.xpose.msra.mxu0 0.0
    %1397 = vmatprep.subr.mxu0 0.0
    %1398 = vmatpush1.xpose.msra.mxu0 %v1274
    %1399 = vmatprep.subr.mxu0 0.0
    %1400 = vmatpush2.xpose.msra.mxu0 0.0
    %1401 = vmatprep.subr.mxu0 0.0
    %1402 = vmatpush2.xpose.msra.mxu0 0.0
    %1403 = vmatprep.subr.mxu0 0.0
    %1404 = vmatpush2.xpose.msra.mxu0 0.0
    %1405 = vmatprep.subr.mxu0 0.0
    %1406 = vmatpush2.xpose.msra.mxu0 0.0
    %1407 = vmatprep.subr.mxu0 0.0
    %1408 = vmatpush2.xpose.msra.mxu0 0.0
    %1409 = vmatprep.subr.mxu0 0.0
    %1410 = vmatpush2.xpose.msra.mxu0 0.0
    %1411 = vmatprep.subr.mxu0 0.0
    %1412 = vmatpush2.xpose.msra.mxu0 0.0
    %1413 = vmatprep.subr.mxu0 0.0
    %1414 = vmatpush2.xpose.msra.mxu0 0.0
    %1415 = vmatprep.subr.mxu0 0.0
    %1416 = vmatpush2.xpose.msra.mxu0 0.0
    %1417 = vmatprep.subr.mxu0 0.0
    %1418 = vmatpush2.xpose.msra.mxu0 0.0
    %1419 = vmatprep.subr.mxu0 0.0
    %1420 = vmatpush2.xpose.msra.mxu0 0.0
    %1421 = vmatprep.subr.mxu0 0.0
    %1422 = vmatpush2.xpose.msra.mxu0 0.0
    %1423 = vmatprep.subr.mxu0 0.0
    %1424 = vmatpush2.xpose.msra.mxu0 0.0
    %1425 = vmatprep.subr.mxu0 0.0
    %1426 = vmatpush2.xpose.msra.mxu0 0.0
    %1427 = vmatprep.subr.mxu0 0.0
    %1428 = vmatpush2.xpose.msra.mxu0 0.0
    %1429 = vmatprep.subr.mxu0 0.0
    %1430 = vmatpush2.xpose.msra.mxu0 0.0
    %1431 = vmatprep.mubr.f32.mxu0 0.0
    %1432 = vmatmul.mubr.f32.gmra.mxu0 %v1278
    %v1433 = vpop.f32.mrf.mxu0
    %v1434 = vadd.f32 0.0, %v1433
    %v1435 = vpop.f32.mrf.mxu0
    %1436 = vmatprep.mubr.f32.mxu0 0.0
    %1437 = vmatmul.mubr.f32.gmra.mxu0 %v1283
    %v1438 = vpop.f32.mrf.mxu0
    %v1439 = vadd.f32 0.0, %v1438
    %v1440 = vpop.f32.mrf.mxu0
    %1441 = vmatprep.mubr.f32.mxu0 0.0
    %1442 = vmatmul.mubr.f32.gmra.mxu0 %v1288
    %v1443 = vpop.f32.mrf.mxu0
    %v1444 = vadd.f32 0.0, %v1443
    %v1445 = vpop.f32.mrf.mxu0
    %1446 = vmatprep.mubr.f32.mxu0 0.0
    %1447 = vmatmul.mubr.f32.gmra.mxu0 %v1293
    %v1448 = vpop.f32.mrf.mxu0
    %v1449 = vadd.f32 0.0, %v1448
    %v1450 = vpop.f32.mrf.mxu0
    %1451 = vdwg.mxu0
    %v1452 = vmul.f32 %v1434, 5.0
    %v1453 = vmul.f32 %v1439, 5.0
    %v1454 = vmul.f32 %v1444, 5.0
    %v1455 = vmul.f32 %v1449, 5.0
    %vm1456 = vcmask 64512
    %v1457 = vsel %vm1456, %v1366, -inf
    %1458 = vmax.xlane.f32.xlu0 %v1457
    %v1459 = vpop.xlane.xlu0 %1458
    %v1460 = vmax.f32 %v1459, 0.0
    %v1461 = vsub.f32 %v1366, %v1460
    %v1462 = vmul.f32 %v1461, 1.442695
    %v1463 = vpow.pop %v1462
    %v1464 = vsel %vm1456, %v1463, 0.0
    %1465 = vadd.xlane.f32.xlu0 %v1464
    %v1466 = vpop.xlane.xlu0 %1465
    %v1467 = vsub.f32 0.0, %v1460
    %v1468 = vmul.f32 %v1467, 1.442695
    %v1469 = vpow.pop %v1468
    %v1470 = vmul.f32 %v1469, 1e-08
    %v1471 = vadd.f32 %v1466, %v1470
    %v1472 = vlog2.pop %v1471
    %v1473 = vmul.f32 %v1472, 0.6931472
    %v1474 = vadd.f32 %v1460, %v1473
    %vm1475 = vcmask 7168
    %v1476 = vsel %vm1475, %v1474, 0.0
    %1477 = vadd.xlane.f32.xlu0 %v1476
    %v1478 = vpop.xlane.xlu0 %1477
    %v1479 = vrot.slane %v1478, 4
    %v1480 = vadd.f32 %v1478, %v1479
    %v1481 = vrot.slane %v1480, 2
    %v1482 = vadd.f32 %v1480, %v1481
    %v1483 = vrot.slane %v1482, 1
    %v1484 = vadd.f32 %v1482, %v1483
    %s1485 = vtos %v1484
    %v1486 = vrcp.pop 8.0
    %s1487 = vtos %v1486
    %s1488 = smul.f32 %s1485, %s1487
    %v1489 = vsel %vm1456, %v1452, -inf
    %1490 = vmax.xlane.f32.xlu0 %v1489
    %v1491 = vpop.xlane.xlu0 %1490
    %v1492 = vsel %vm1456, %v1453, -inf
    %1493 = vmax.xlane.f32.xlu0 %v1492
    %v1494 = vpop.xlane.xlu0 %1493
    %v1495 = vsel %vm1456, %v1454, -inf
    %1496 = vmax.xlane.f32.xlu0 %v1495
    %v1497 = vpop.xlane.xlu0 %1496
    %v1498 = vsel %vm1456, %v1455, -inf
    %1499 = vmax.xlane.f32.xlu0 %v1498
    %v1500 = vpop.xlane.xlu0 %1499
    %v1501 = vmax.f32 %v1491, 0.0
    %v1502 = vmax.f32 %v1494, 0.0
    %v1503 = vmax.f32 %v1497, 0.0
    %v1504 = vmax.f32 %v1500, 0.0
    %v1505 = vsub.f32 %v1452, %v1501
    %v1506 = vsub.f32 %v1453, %v1502
    %v1507 = vsub.f32 %v1454, %v1503
    %v1508 = vsub.f32 %v1455, %v1504
    %v1509 = vmul.f32 %v1505, 1.442695
    %v1510 = vpow.pop %v1509
    %v1511 = vmul.f32 %v1506, 1.442695
    %v1512 = vpow.pop %v1511
    %v1513 = vmul.f32 %v1507, 1.442695
    %v1514 = vpow.pop %v1513
    %v1515 = vmul.f32 %v1508, 1.442695
    %v1516 = vpow.pop %v1515
    %v1517 = vsel %vm1456, %v1510, 0.0
    %1518 = vadd.xlane.f32.xlu0 %v1517
    %v1519 = vpop.xlane.xlu0 %1518
    %v1520 = vsel %vm1456, %v1512, 0.0
    %1521 = vadd.xlane.f32.xlu0 %v1520
    %v1522 = vpop.xlane.xlu0 %1521
    %v1523 = vsel %vm1456, %v1514, 0.0
    %1524 = vadd.xlane.f32.xlu0 %v1523
    %v1525 = vpop.xlane.xlu0 %1524
    %v1526 = vsel %vm1456, %v1516, 0.0
    %1527 = vadd.xlane.f32.xlu0 %v1526
    %v1528 = vpop.xlane.xlu0 %1527
    %v1529 = vsub.f32 0.0, %v1501
    %v1530 = vsub.f32 0.0, %v1502
    %v1531 = vsub.f32 0.0, %v1503
    %v1532 = vsub.f32 0.0, %v1504
    %v1533 = vmul.f32 %v1529, 1.442695
    %v1534 = vpow.pop %v1533
    %v1535 = vmul.f32 %v1530, 1.442695
    %v1536 = vpow.pop %v1535
    %v1537 = vmul.f32 %v1531, 1.442695
    %v1538 = vpow.pop %v1537
    %v1539 = vmul.f32 %v1532, 1.442695
    %v1540 = vpow.pop %v1539
    %v1541 = vmul.f32 %v1534, 1e-08
    %v1542 = vmul.f32 %v1536, 1e-08
    %v1543 = vmul.f32 %v1538, 1e-08
    %v1544 = vmul.f32 %v1540, 1e-08
    %v1545 = vadd.f32 %v1519, %v1541
    %v1546 = vadd.f32 %v1522, %v1542
    %v1547 = vadd.f32 %v1525, %v1543
    %v1548 = vadd.f32 %v1528, %v1544
    %v1549 = vlog2.pop %v1545
    %v1550 = vmul.f32 %v1549, 0.6931472
    %v1551 = vlog2.pop %v1546
    %v1552 = vmul.f32 %v1551, 0.6931472
    %v1553 = vlog2.pop %v1547
    %v1554 = vmul.f32 %v1553, 0.6931472
    %v1555 = vlog2.pop %v1548
    %v1556 = vmul.f32 %v1555, 0.6931472
    %v1557 = vadd.f32 %v1501, %v1550
    %v1558 = vadd.f32 %v1502, %v1552
    %v1559 = vadd.f32 %v1503, %v1554
    %v1560 = vadd.f32 %v1504, %v1556
    %v1561 = vsel %vm1475, %v1557, 0.0
    %v1562 = vsel %vm1475, %v1558, 0.0
    %v1563 = vadd.f32 %v1561, %v1562
    %v1564 = vsel %vm1475, %v1559, 0.0
    %v1565 = vadd.f32 %v1563, %v1564
    %v1566 = vsel %vm1475, %v1560, 0.0
    %v1567 = vadd.f32 %v1565, %v1566
    %1568 = vadd.xlane.f32.xlu0 %v1567
    %v1569 = vpop.xlane.xlu0 %1568
    %v1570 = vrot.slane %v1569, 4
    %v1571 = vadd.f32 %v1569, %v1570
    %v1572 = vrot.slane %v1571, 2
    %v1573 = vadd.f32 %v1571, %v1572
    %v1574 = vrot.slane %v1573, 1
    %v1575 = vadd.f32 %v1573, %v1574
    %s1576 = vtos %v1575
    %v1577 = vrcp.pop 32.0
    %s1578 = vtos %v1577
    %s1579 = smul.f32 %s1576, %s1578
    %s1580 = sadd.f32 %s1488, %s1579
    %v1581 = vmul.f32 %v1183, %v1181
    %1582 = vadd.xlane.f32.xlu0 %v1581
    %v1583 = vpop.xlane.xlu0 %1582
    %v1584 = vmul.f32 %v1583, 5.0
    %v1585 = vmax.f32 %v1584, -1.0
    %v1586 = vmin.f32 %v1585, 1.0
    %v1587 = vsel %vm1475, %v1586, 0.0
    %1588 = vadd.xlane.f32.xlu0 %v1587
    %v1589 = vpop.xlane.xlu0 %1588
    %v1590 = vrot.slane %v1589, 4
    %v1591 = vadd.f32 %v1589, %v1590
    %v1592 = vrot.slane %v1591, 2
    %v1593 = vadd.f32 %v1591, %v1592
    %v1594 = vrot.slane %v1593, 1
    %v1595 = vadd.f32 %v1593, %v1594
    %s1596 = vtos %v1595
    %v1597 = vrcp.pop 8.0
    %s1598 = vtos %v1597
    %s1599 = smul.f32 %s1596, %s1598
    %v1600 = vmul.f32 %v1274, %v1272
    %1601 = vadd.xlane.f32.xlu0 %v1600
    %v1602 = vpop.xlane.xlu0 %1601
    %v1603 = vmul.f32 %v1602, 5.0
    %v1604 = vmax.f32 %v1603, -1.0
    %v1605 = vmin.f32 %v1604, 1.0
    %v1606 = vsel %vm1475, %v1605, 0.0
    %1607 = vadd.xlane.f32.xlu0 %v1606
    %v1608 = vpop.xlane.xlu0 %1607
    %v1609 = vrot.slane %v1608, 4
    %v1610 = vadd.f32 %v1608, %v1609
    %v1611 = vrot.slane %v1610, 2
    %v1612 = vadd.f32 %v1610, %v1611
    %v1613 = vrot.slane %v1612, 1
    %v1614 = vadd.f32 %v1612, %v1613
    %s1615 = vtos %v1614
    %v1616 = vrcp.pop 8.0
    %s1617 = vtos %v1616
    %s1618 = smul.f32 %s1615, %s1617
    %s1619 = sadd.f32 %s1599, %s1618
    %s1620 = ssub.f32 %s1580, %s1619
    %s1621 = smul.f32 %s1620, 0.2
    %v1622 = vstv %s1621
    %v1623 = vadd.f32 %v1622, 0.0
    %1624 = vst [vmem:[%s10] sm:$0x1] %v1623
    // Predicated region
    $region62: #{top_hicl_forward.1} parent=1 // pred_check
      _
    $region63: #{top_hicl_forward.1} parent=1 // pred_check_branch
      %1626 = sbr.rel (0) target = $region65
    $region64: #{top_hicl_forward.1} parent=1 // pred_region
      _
    $region65: #{top_hicl_forward.1} parent=1 // pred_fallthru
      _
    // Predicated region
    $region66: #{top_hicl_forward.1} parent=1 // pred_check
      _
    $region67: #{top_hicl_forward.1} parent=1 // pred_check_branch
      %1628 = sbr.rel (0) target = $region69
    $region68: #{top_hicl_forward.1} parent=1 // pred_region
      _
    $region69: #{top_hicl_forward.1} parent=1 // pred_fallthru
      _
    %1629 = vsyncpa [#allocation3], 1
    %1630 = vsyncpa [#allocation5], 1
    %1631 = vsyncpa [#allocation8], 1

</llo_original>
